<compile_context>
chip_gen: v5e
topology: v5e:2x2
jax: 0.10.0
libtpu: 0.0.40
codegen_flags: <defaults>
</compile_context>

<pallas_src>
import jax
import jax.numpy as jnp
import numpy as np
from jax.experimental import pallas as pl
from jax.experimental.pallas import tpu as pltpu


def _decoder_kernel(
    emb_ref, dec0_ref, h0_ref, c0_ref, ctx_ref,
    w_xh_ref, b_xh_ref, w_out_ref, b_out_ref,
    w_inp_ref, b_inp_ref, w_ctx_ref, b_ctx_ref, v_ref,
    outputs_ref, h_out_ref, c_out_ref,
):
    tb, L, E = emb_ref.shape          # batch tile, input length, embedding dim
    H = h0_ref.shape[1]
    T = outputs_ref.shape[0]          # summary length (static)

    # ---------- loop-invariant work: done ONCE per batch tile ----------
    # Conv1d(H, H, 1) on the context does not depend on the decode step -> hoisted.
    ctx_proj = (
        jnp.dot(ctx_ref[...].reshape(tb * L, H), w_ctx_ref[...],
                preferred_element_type=jnp.float32)
        + b_ctx_ref[...]
    ).reshape(tb, L, H)                                          # [tb, L, H]

    emb = emb_ref[...]                                           # [tb, L, E]
    w_xh = w_xh_ref[...]                                         # [E+H, 4H]
    b_xh = b_xh_ref[...]                                         # [1, 4H]
    w_out = w_out_ref[...]                                       # [2H, H]
    b_out = b_out_ref[...]                                       # [1, H]
    w_inp = w_inp_ref[...]                                       # [H, H]
    b_inp = b_inp_ref[...]                                       # [1, H]
    v = v_ref[...]                                               # [1, H]
    iota_l = jax.lax.broadcasted_iota(jnp.int32, (tb, L), 1)

    # ---------- autoregressive decode: in-kernel fori_loop over T ----------
    def step(t, carry):
        x, h, c, mask = carry                                    # [tb,E] [tb,H] [tb,H] [tb,L]

        # Fused LSTM cell: cat([x, h]) @ cat([w_ih; w_hh]) + (b_ih + b_hh)
        gates = jnp.dot(jnp.concatenate([x, h], axis=1), w_xh,
                        preferred_element_type=jnp.float32) + b_xh   # [tb, 4H]
        i_g = jax.nn.sigmoid(gates[:, 0:H])
        f_g = jax.nn.sigmoid(gates[:, H:2 * H])
        g_g = jnp.tanh(gates[:, 2 * H:3 * H])
        o_g = jax.nn.sigmoid(gates[:, 3 * H:4 * H])
        c_t = f_g * c + i_g * g_g                                # [tb, H]
        h_lstm = o_g * jnp.tanh(c_t)                             # [tb, H]

        # Attention over the pre-projected context.
        inp_lin = jnp.dot(h_lstm, w_inp,
                          preferred_element_type=jnp.float32) + b_inp   # [tb, H]
        t3 = jnp.tanh(inp_lin[:, None, :] + ctx_proj)            # [tb, L, H]
        att = jnp.sum(t3 * v[None, :, :], axis=-1)               # [tb, L]
        att = jnp.where(mask == 0.0, -jnp.inf, att)              # att[mask==0] = -inf
        att_max = jnp.max(att, axis=-1, keepdims=True)
        e = jnp.exp(att - att_max)
        alpha = e / jnp.sum(e, axis=-1, keepdims=True)           # softmax over L
        hidden_state = jnp.sum(ctx_proj * alpha[:, :, None], axis=1)    # [tb, H]

        # Fused hidden_out on cat([hidden_state, h_lstm]).
        h_new = jnp.tanh(
            jnp.dot(jnp.concatenate([hidden_state, h_lstm], axis=1), w_out,
                    preferred_element_type=jnp.float32) + b_out)        # [tb, H]

        # Pointer selection (first-occurrence argmax), mask update, next input.
        masked = alpha * mask                                    # [tb, L]
        m_max = jnp.max(masked, axis=-1, keepdims=True)
        idx = jnp.min(jnp.where(masked == m_max, iota_l, jnp.int32(L)),
                      axis=-1, keepdims=True)                    # [tb, 1] first argmax
        one_hot = (iota_l == idx).astype(jnp.float32)            # [tb, L]
        new_mask = mask * (1.0 - one_hot)
        # TODO(synk): at large L*E replace this one-hot contraction with a
        # scalar-indexed / DMA row gather of embedded_inputs.
        x_next = jnp.sum(emb * one_hot[:, :, None], axis=1)      # [tb, E]

        outputs_ref[t] = alpha                                   # [T, tb, L] slab
        return (x_next, h_new, c_t, new_mask)

    init = (dec0_ref[...], h0_ref[...], c0_ref[...], jnp.ones((tb, L), jnp.float32))
    _, h_f, c_f, _ = jax.lax.fori_loop(0, T, step, init, unroll=(T <= 8))

    # Final recurrent state written once (not per decode step).
    h_out_ref[...] = h_f
    c_out_ref[...] = c_f


def decoder_forward(embedded_inputs, decoder_input, h0, c0, context,
                    summary_length, params, *, batch_tiles=1):
    """Mirrors Decoder.forward. Returns ((outputs [B,T,L], pointers [B,T]), (h, c)).

    batch_tiles: grid size over the batch, marked "parallel" (use >1 on v7x to split
    work across its two TensorCores). Requires B % batch_tiles == 0 and, when >1,
    B // batch_tiles should equal B or be a multiple of 8 to keep blocks tile-legal.
    """
    B, L, E = embedded_inputs.shape
    H = h0.shape[1]
    T = int(summary_length)            # NOTE: semantics assume T <= L (see header note).
    assert B % batch_tiles == 0
    tb = B // batch_tiles

    # Fuse the step matmuls once, outside the kernel (weights are step-invariant).
    w_xh = jnp.concatenate([params["w_ih"], params["w_hh"]], axis=0)        # [E+H, 4H]
    b_xh = params["b_ih"] + params["b_hh"]                                  # [1, 4H]
    w_out = jnp.concatenate([params["w_out_a"], params["w_out_b"]], axis=0)  # [2H, H]

    def inv(shape):   # grid-invariant (weight) spec
        nd = len(shape)
        return pl.BlockSpec(shape, lambda i, _nd=nd: (0,) * _nd)

    in_specs = [
        pl.BlockSpec((tb, L, E), lambda i: (i, 0, 0)),   # embedded_inputs
        pl.BlockSpec((tb, E), lambda i: (i, 0)),         # decoder_input
        pl.BlockSpec((tb, H), lambda i: (i, 0)),         # h0
        pl.BlockSpec((tb, H), lambda i: (i, 0)),         # c0
        pl.BlockSpec((tb, L, H), lambda i: (i, 0, 0)),   # context
        inv((E + H, 4 * H)), inv((1, 4 * H)),            # fused LSTM weight/bias
        inv((2 * H, H)), inv((1, H)),                    # fused hidden_out weight/bias
        inv((H, H)), inv((1, H)),                        # attention input_linear
        inv((H, H)), inv((1, H)),                        # attention context_linear (Conv1d k=1)
        inv((1, H)),                                     # attention V
    ]
    out_specs = [
        pl.BlockSpec((T, tb, L), lambda i: (0, i, 0)),   # per-step alphas
        pl.BlockSpec((tb, H), lambda i: (i, 0)),         # final h
        pl.BlockSpec((tb, H), lambda i: (i, 0)),         # final c
    ]
    out_shape = (
        jax.ShapeDtypeStruct((T, B, L), jnp.float32),
        jax.ShapeDtypeStruct((B, H), jnp.float32),
        jax.ShapeDtypeStruct((B, H), jnp.float32),
    )
    grid_spec = pltpu.PrefetchScalarGridSpec(
        num_scalar_prefetch=0,
        grid=(batch_tiles,),
        in_specs=in_specs,
        out_specs=out_specs,
    )
    outputs_tbl, h_fin, c_fin = pl.pallas_call(
        _decoder_kernel,
        out_shape=out_shape,
        grid_spec=grid_spec,
        compiler_params=pltpu.CompilerParams(dimension_semantics=("parallel",)),
    )(
        embedded_inputs, decoder_input, h0, c0, context,
        w_xh, b_xh, w_out, params["b_out"],
        params["w_inp"], params["b_inp"], params["w_ctx"], params["b_ctx"],
        params["v"],
    )

    outputs = jnp.transpose(outputs_tbl, (1, 0, 2))              # [B, T, L]
    # pointers = argmax_L(alpha * mask). alpha is exactly 0 at masked positions
    # (softmax of -inf) and > 0 elsewhere, so argmax over alpha reproduces the
    # in-kernel selection exactly, including first-occurrence tie-breaking.
    pointers = jnp.argmax(outputs, axis=-1).astype(jnp.int32)    # [B, T]
    return (outputs, pointers), (h_fin, c_fin)


def reference(emb, dec0, h0, c0, context, T, p):
    """Pure-JAX mirror of the PyTorch Decoder.forward semantics (unfused weights)."""
    B, L, E = emb.shape
    H = h0.shape[1]
    mask = jnp.ones((B, L), jnp.float32)
    x, h, c = dec0, h0, c0
    iota = jnp.arange(L, dtype=jnp.int32)[None, :]
    ctx3 = (context.reshape(B * L, H) @ p["w_ctx"] + p["b_ctx"]).reshape(B, L, H)
    outs_list, ptr_list = [], []
    for _ in range(T):
        gates = x @ p["w_ih"] + p["b_ih"] + h @ p["w_hh"] + p["b_hh"]
        i_g = jax.nn.sigmoid(gates[:, :H])
        f_g = jax.nn.sigmoid(gates[:, H:2 * H])
        g_g = jnp.tanh(gates[:, 2 * H:3 * H])
        o_g = jax.nn.sigmoid(gates[:, 3 * H:])
        c = f_g * c + i_g * g_g
        h_lstm = o_g * jnp.tanh(c)
        inp_lin = h_lstm @ p["w_inp"] + p["b_inp"]
        t3 = jnp.tanh(inp_lin[:, None, :] + ctx3)
        att = jnp.sum(t3 * p["v"][None, :, :], axis=-1)
        att = jnp.where(mask == 0.0, -jnp.inf, att)
        alpha = jax.nn.softmax(att, axis=-1)
        hidden_state = jnp.sum(ctx3 * alpha[:, :, None], axis=1)
        h = jnp.tanh(hidden_state @ p["w_out_a"] + h_lstm @ p["w_out_b"] + p["b_out"])
        masked = alpha * mask
        idx = jnp.argmax(masked, axis=-1).astype(jnp.int32)
        one_hot = (iota == idx[:, None]).astype(jnp.float32)
        mask = mask * (1.0 - one_hot)
        x = jnp.sum(emb * one_hot[:, :, None], axis=1)
        outs_list.append(alpha)
        ptr_list.append(idx)
    outputs = jnp.stack(outs_list, axis=1)    # [B, T, L]
    pointers = jnp.stack(ptr_list, axis=1)    # [B, T]
    return (outputs, pointers), (h, c)


if __name__ == "__main__":
    B, L, E, H, T = 2, 8, 32, 32, 4   # batch, input_length, embedding_dim, hidden_dim, summary_length

    key = jax.random.PRNGKey(0)
    keys = jax.random.split(key, 20)

    def u(k, shape, scale=0.1):
        return jax.random.uniform(k, shape, jnp.float32, -scale, scale)

    # Deterministic synthetic parameters (Linear weights stored as [in, out]).
    params = dict(
        w_ih=u(keys[0], (E, 4 * H)), b_ih=u(keys[1], (1, 4 * H)),
        w_hh=u(keys[2], (H, 4 * H)), b_hh=u(keys[3], (1, 4 * H)),
        w_out_a=u(keys[4], (H, H)), w_out_b=u(keys[5], (H, H)), b_out=u(keys[6], (1, H)),
        w_inp=u(keys[7], (H, H)), b_inp=u(keys[8], (1, H)),
        w_ctx=u(keys[9], (H, H)), b_ctx=u(keys[10], (1, H)),       # Conv1d(H,H,1) as matmul
        v=jax.random.uniform(keys[11], (1, H), jnp.float32, -1.0, 1.0),
    )

    embedded_inputs = u(keys[12], (B, L, E), 1.0)
    decoder_input = u(keys[13], (B, E), 1.0)
    h0 = u(keys[14], (B, H), 1.0)
    c0 = u(keys[15], (B, H), 1.0)
    context = u(keys[16], (B, L, H), 1.0)

    (outputs, pointers), (hf, cf) = decoder_forward(
        embedded_inputs, decoder_input, h0, c0, context, T, params, batch_tiles=1)
    jax.block_until_ready((outputs, pointers, hf, cf))

    (r_out, r_ptr), (r_h, r_c) = reference(
        embedded_inputs, decoder_input, h0, c0, context, T, params)
    np.testing.assert_allclose(np.asarray(outputs), np.asarray(r_out), atol=1e-4, rtol=1e-4)
    np.testing.assert_array_equal(np.asarray(pointers), np.asarray(r_ptr))
    np.testing.assert_allclose(np.asarray(hf), np.asarray(r_h), atol=1e-4, rtol=1e-4)
    np.testing.assert_allclose(np.asarray(cf), np.asarray(r_c), atol=1e-4, rtol=1e-4)

    print("KERNEL_OK")
</pallas_src>

<mosaic_0001>
module attributes {stable_mosaic.version = 11 : i64} {
  func.func @_decoder_kernel(%arg0: i32, %arg1: memref<2x8x32xf32, #tpu.memory_space<vmem>>, %arg2: memref<2x32xf32, #tpu.memory_space<vmem>>, %arg3: memref<2x32xf32, #tpu.memory_space<vmem>>, %arg4: memref<2x32xf32, #tpu.memory_space<vmem>>, %arg5: memref<2x8x32xf32, #tpu.memory_space<vmem>>, %arg6: memref<64x128xf32, #tpu.memory_space<vmem>>, %arg7: memref<1x128xf32, #tpu.memory_space<vmem>>, %arg8: memref<64x32xf32, #tpu.memory_space<vmem>>, %arg9: memref<1x32xf32, #tpu.memory_space<vmem>>, %arg10: memref<32x32xf32, #tpu.memory_space<vmem>>, %arg11: memref<1x32xf32, #tpu.memory_space<vmem>>, %arg12: memref<32x32xf32, #tpu.memory_space<vmem>>, %arg13: memref<1x32xf32, #tpu.memory_space<vmem>>, %arg14: memref<1x32xf32, #tpu.memory_space<vmem>>, %arg15: memref<4x2x8xf32, #tpu.memory_space<vmem>>, %arg16: memref<2x32xf32, #tpu.memory_space<vmem>>, %arg17: memref<2x32xf32, #tpu.memory_space<vmem>>) attributes {dimension_semantics = [#tpu.dimension_semantics<parallel>], iteration_bounds = array<i64: 1>, scalar_prefetch = 0 : i64, scratch_operands = 0 : i64, tpu.core_type = #tpu.core_type<tc>, window_params = [{transform_indices = @transform_0, window_bounds = array<i64: 2, 8, 32>}, {transform_indices = @transform_1, window_bounds = array<i64: 2, 32>}, {transform_indices = @transform_2, window_bounds = array<i64: 2, 32>}, {transform_indices = @transform_3, window_bounds = array<i64: 2, 32>}, {transform_indices = @transform_4, window_bounds = array<i64: 2, 8, 32>}, {pipeline_mode = #tpu.pipeline_mode<synchronous>, transform_indices = @transform_5, window_bounds = array<i64: 64, 128>}, {pipeline_mode = #tpu.pipeline_mode<synchronous>, transform_indices = @transform_6, window_bounds = array<i64: 1, 128>}, {pipeline_mode = #tpu.pipeline_mode<synchronous>, transform_indices = @transform_7, window_bounds = array<i64: 64, 32>}, {pipeline_mode = #tpu.pipeline_mode<synchronous>, transform_indices = @transform_8, window_bounds = array<i64: 1, 32>}, {pipeline_mode = #tpu.pipeline_mode<synchronous>, transform_indices = @transform_9, window_bounds = array<i64: 32, 32>}, {pipeline_mode = #tpu.pipeline_mode<synchronous>, transform_indices = @transform_10, window_bounds = array<i64: 1, 32>}, {pipeline_mode = #tpu.pipeline_mode<synchronous>, transform_indices = @transform_11, window_bounds = array<i64: 32, 32>}, {pipeline_mode = #tpu.pipeline_mode<synchronous>, transform_indices = @transform_12, window_bounds = array<i64: 1, 32>}, {pipeline_mode = #tpu.pipeline_mode<synchronous>, transform_indices = @transform_13, window_bounds = array<i64: 1, 32>}, {transform_indices = @transform_14, window_bounds = array<i64: 4, 2, 8>}, {transform_indices = @transform_15, window_bounds = array<i64: 2, 32>}, {transform_indices = @transform_16, window_bounds = array<i64: 2, 32>}]} {
    %c0 = arith.constant 0 : index
    %c0_0 = arith.constant 0 : index
    %c0_1 = arith.constant 0 : index
    %0 = vector.load %arg5[%c0, %c0_0, %c0_1] : memref<2x8x32xf32, #tpu.memory_space<vmem>>, vector<2x8x32xf32>
    %1 = vector.shape_cast %0 : vector<2x8x32xf32> to vector<16x32xf32>
    %c0_2 = arith.constant 0 : index
    %c0_3 = arith.constant 0 : index
    %2 = vector.load %arg12[%c0_2, %c0_3] : memref<32x32xf32, #tpu.memory_space<vmem>>, vector<32x32xf32>
    %cst = arith.constant dense<0.000000e+00> : vector<16x32xf32>
    %3 = tpu.matmul %1, %2, %cst {dimension_numbers = #tpu.dot_dimension_numbers<[1], [0], [0], [1], [0, 0, 1, 1], [], []>} : vector<16x32xf32>, vector<32x32xf32>, vector<16x32xf32> -> vector<16x32xf32>
    %c0_4 = arith.constant 0 : index
    %c0_5 = arith.constant 0 : index
    %4 = vector.load %arg13[%c0_4, %c0_5] : memref<1x32xf32, #tpu.memory_space<vmem>>, vector<1x32xf32>
    %5 = vector.broadcast %4 : vector<1x32xf32> to vector<16x32xf32>
    %6 = arith.addf %3, %5 : vector<16x32xf32>
    %7 = vector.shape_cast %6 : vector<16x32xf32> to vector<2x8x32xf32>
    %c0_6 = arith.constant 0 : index
    %c0_7 = arith.constant 0 : index
    %c0_8 = arith.constant 0 : index
    %8 = vector.load %arg1[%c0_6, %c0_7, %c0_8] : memref<2x8x32xf32, #tpu.memory_space<vmem>>, vector<2x8x32xf32>
    %c0_9 = arith.constant 0 : index
    %c0_10 = arith.constant 0 : index
    %9 = vector.load %arg6[%c0_9, %c0_10] : memref<64x128xf32, #tpu.memory_space<vmem>>, vector<64x128xf32>
    %c0_11 = arith.constant 0 : index
    %c0_12 = arith.constant 0 : index
    %10 = vector.load %arg7[%c0_11, %c0_12] : memref<1x128xf32, #tpu.memory_space<vmem>>, vector<1x128xf32>
    %c0_13 = arith.constant 0 : index
    %c0_14 = arith.constant 0 : index
    %11 = vector.load %arg8[%c0_13, %c0_14] : memref<64x32xf32, #tpu.memory_space<vmem>>, vector<64x32xf32>
    %c0_15 = arith.constant 0 : index
    %c0_16 = arith.constant 0 : index
    %12 = vector.load %arg9[%c0_15, %c0_16] : memref<1x32xf32, #tpu.memory_space<vmem>>, vector<1x32xf32>
    %c0_17 = arith.constant 0 : index
    %c0_18 = arith.constant 0 : index
    %13 = vector.load %arg10[%c0_17, %c0_18] : memref<32x32xf32, #tpu.memory_space<vmem>>, vector<32x32xf32>
    %c0_19 = arith.constant 0 : index
    %c0_20 = arith.constant 0 : index
    %14 = vector.load %arg11[%c0_19, %c0_20] : memref<1x32xf32, #tpu.memory_space<vmem>>, vector<1x32xf32>
    %c0_21 = arith.constant 0 : index
    %c0_22 = arith.constant 0 : index
    %15 = vector.load %arg14[%c0_21, %c0_22] : memref<1x32xf32, #tpu.memory_space<vmem>>, vector<1x32xf32>
    %16 = tpu.iota {dimensions = array<i32: 1>} : vector<2x8xi32>
    %c0_23 = arith.constant 0 : index
    %c0_24 = arith.constant 0 : index
    %17 = vector.load %arg2[%c0_23, %c0_24] : memref<2x32xf32, #tpu.memory_space<vmem>>, vector<2x32xf32>
    %c0_25 = arith.constant 0 : index
    %c0_26 = arith.constant 0 : index
    %18 = vector.load %arg3[%c0_25, %c0_26] : memref<2x32xf32, #tpu.memory_space<vmem>>, vector<2x32xf32>
    %c0_27 = arith.constant 0 : index
    %c0_28 = arith.constant 0 : index
    %19 = vector.load %arg4[%c0_27, %c0_28] : memref<2x32xf32, #tpu.memory_space<vmem>>, vector<2x32xf32>
    %cst_29 = arith.constant 1.000000e+00 : f32
    %20 = vector.broadcast %cst_29 : f32 to vector<2x8xf32>
    %c0_i32 = arith.constant 0 : i32
    %21 = tpu.concatenate %17, %18 in 1 : vector<2x32xf32>, vector<2x32xf32> -> vector<2x64xf32>
    %cst_30 = arith.constant dense<0.000000e+00> : vector<2x128xf32>
    %22 = tpu.matmul %21, %9, %cst_30 {dimension_numbers = #tpu.dot_dimension_numbers<[1], [0], [0], [1], [0, 0, 1, 1], [], []>} : vector<2x64xf32>, vector<64x128xf32>, vector<2x128xf32> -> vector<2x128xf32>
    %23 = vector.broadcast %10 : vector<1x128xf32> to vector<2x128xf32>
    %24 = arith.addf %22, %23 : vector<2x128xf32>
    %25 = vector.extract_strided_slice %24 {offsets = [0, 0], sizes = [2, 32], strides = [1, 1]} : vector<2x128xf32> to vector<2x32xf32>
    %26 = arith.negf %25 : vector<2x32xf32>
    %27 = math.exp %26 : vector<2x32xf32>
    %cst_31 = arith.constant 1.000000e+00 : f32
    %28 = vector.broadcast %cst_31 : f32 to vector<2x32xf32>
    %29 = arith.addf %28, %27 : vector<2x32xf32>
    %30 = arith.divf %28, %29 : vector<2x32xf32>
    %31 = vector.extract_strided_slice %24 {offsets = [0, 32], sizes = [2, 32], strides = [1, 1]} : vector<2x128xf32> to vector<2x32xf32>
    %32 = arith.negf %31 : vector<2x32xf32>
    %33 = math.exp %32 : vector<2x32xf32>
    %cst_32 = arith.constant 1.000000e+00 : f32
    %34 = vector.broadcast %cst_32 : f32 to vector<2x32xf32>
    %35 = arith.addf %34, %33 : vector<2x32xf32>
    %36 = arith.divf %34, %35 : vector<2x32xf32>
    %37 = vector.extract_strided_slice %24 {offsets = [0, 64], sizes = [2, 32], strides = [1, 1]} : vector<2x128xf32> to vector<2x32xf32>
    %38 = math.tanh %37 : vector<2x32xf32>
    %39 = vector.extract_strided_slice %24 {offsets = [0, 96], sizes = [2, 32], strides = [1, 1]} : vector<2x128xf32> to vector<2x32xf32>
    %40 = arith.negf %39 : vector<2x32xf32>
    %41 = math.exp %40 : vector<2x32xf32>
    %cst_33 = arith.constant 1.000000e+00 : f32
    %42 = vector.broadcast %cst_33 : f32 to vector<2x32xf32>
    %43 = arith.addf %42, %41 : vector<2x32xf32>
    %44 = arith.divf %42, %43 : vector<2x32xf32>
    %45 = arith.mulf %36, %19 : vector<2x32xf32>
    %46 = arith.mulf %30, %38 : vector<2x32xf32>
    %47 = arith.addf %45, %46 : vector<2x32xf32>
    %48 = math.tanh %47 : vector<2x32xf32>
    %49 = arith.mulf %44, %48 : vector<2x32xf32>
    %cst_34 = arith.constant dense<0.000000e+00> : vector<2x32xf32>
    %50 = tpu.matmul %49, %13, %cst_34 {dimension_numbers = #tpu.dot_dimension_numbers<[1], [0], [0], [1], [0, 0, 1, 1], [], []>} : vector<2x32xf32>, vector<32x32xf32>, vector<2x32xf32> -> vector<2x32xf32>
    %51 = vector.broadcast %14 : vector<1x32xf32> to vector<2x32xf32>
    %52 = arith.addf %50, %51 : vector<2x32xf32>
    %53 = vector.shape_cast %52 : vector<2x32xf32> to vector<2x1x32xf32>
    %54 = vector.broadcast %53 : vector<2x1x32xf32> to vector<2x8x32xf32>
    %55 = arith.addf %54, %7 : vector<2x8x32xf32>
    %56 = math.tanh %55 : vector<2x8x32xf32>
    %57 = vector.shape_cast %15 : vector<1x32xf32> to vector<1x1x32xf32>
    %58 = vector.broadcast %57 : vector<1x1x32xf32> to vector<2x8x32xf32>
    %59 = arith.mulf %56, %58 : vector<2x8x32xf32>
    %cst_35 = arith.constant dense<0.000000e+00> : vector<2x8xf32>
    %60 = vector.multi_reduction <add>, %59, %cst_35 [2] : vector<2x8x32xf32> to vector<2x8xf32>
    %cst_36 = arith.constant 0.000000e+00 : f32
    %61 = vector.broadcast %cst_36 : f32 to vector<2x8xf32>
    %62 = arith.cmpf oeq, %20, %61 : vector<2x8xf32>
    %cst_37 = arith.constant 0xFF800000 : f32
    %63 = vector.broadcast %cst_37 : f32 to vector<2x8xf32>
    %64 = arith.select %62, %63, %60 : vector<2x8xi1>, vector<2x8xf32>
    %cst_38 = arith.constant dense<0xFF800000> : vector<2xf32>
    %65 = vector.multi_reduction <maximumf>, %64, %cst_38 [1] : vector<2x8xf32> to vector<2xf32>
    %66 = vector.shape_cast %65 : vector<2xf32> to vector<2x1xf32>
    %67 = vector.broadcast %66 : vector<2x1xf32> to vector<2x8xf32>
    %68 = arith.subf %64, %67 : vector<2x8xf32>
    %69 = math.exp %68 : vector<2x8xf32>
    %cst_39 = arith.constant dense<0.000000e+00> : vector<2xf32>
    %70 = vector.multi_reduction <add>, %69, %cst_39 [1] : vector<2x8xf32> to vector<2xf32>
    %71 = vector.shape_cast %70 : vector<2xf32> to vector<2x1xf32>
    %72 = vector.broadcast %71 : vector<2x1xf32> to vector<2x8xf32>
    %73 = arith.divf %69, %72 : vector<2x8xf32>
    %74 = vector.shape_cast %73 : vector<2x8xf32> to vector<2x8x1xf32>
    %75 = vector.broadcast %74 : vector<2x8x1xf32> to vector<2x8x32xf32>
    %76 = arith.mulf %7, %75 : vector<2x8x32xf32>
    %cst_40 = arith.constant dense<0.000000e+00> : vector<2x32xf32>
    %77 = vector.multi_reduction <add>, %76, %cst_40 [1] : vector<2x8x32xf32> to vector<2x32xf32>
    %78 = tpu.concatenate %77, %49 in 1 : vector<2x32xf32>, vector<2x32xf32> -> vector<2x64xf32>
    %cst_41 = arith.constant dense<0.000000e+00> : vector<2x32xf32>
    %79 = tpu.matmul %78, %11, %cst_41 {dimension_numbers = #tpu.dot_dimension_numbers<[1], [0], [0], [1], [0, 0, 1, 1], [], []>} : vector<2x64xf32>, vector<64x32xf32>, vector<2x32xf32> -> vector<2x32xf32>
    %80 = vector.broadcast %12 : vector<1x32xf32> to vector<2x32xf32>
    %81 = arith.addf %79, %80 : vector<2x32xf32>
    %82 = math.tanh %81 : vector<2x32xf32>
    %83 = arith.mulf %73, %20 : vector<2x8xf32>
    %cst_42 = arith.constant dense<0xFF800000> : vector<2xf32>
    %84 = vector.multi_reduction <maximumf>, %83, %cst_42 [1] : vector<2x8xf32> to vector<2xf32>
    %85 = vector.shape_cast %84 : vector<2xf32> to vector<2x1xf32>
    %86 = vector.broadcast %85 : vector<2x1xf32> to vector<2x8xf32>
    %87 = arith.cmpf oeq, %83, %86 : vector<2x8xf32>
    %c8_i32 = arith.constant 8 : i32
    %88 = vector.broadcast %c8_i32 : i32 to vector<2x8xi32>
    %89 = arith.select %87, %16, %88 : vector<2x8xi1>, vector<2x8xi32>
    %cst_43 = arith.constant dense<2147483647> : vector<2xi32>
    %90 = vector.multi_reduction <minsi>, %89, %cst_43 [1] : vector<2x8xi32> to vector<2xi32>
    %91 = vector.shape_cast %90 : vector<2xi32> to vector<2x1xi32>
    %92 = vector.broadcast %91 : vector<2x1xi32> to vector<2x8xi32>
    %93 = arith.cmpi eq, %16, %92 : vector<2x8xi32>
    %94 = arith.extui %93 : vector<2x8xi1> to vector<2x8xi32>
    %95 = arith.sitofp %94 : vector<2x8xi32> to vector<2x8xf32>
    %cst_44 = arith.constant 1.000000e+00 : f32
    %96 = vector.broadcast %cst_44 : f32 to vector<2x8xf32>
    %97 = arith.subf %96, %95 : vector<2x8xf32>
    %98 = arith.mulf %20, %97 : vector<2x8xf32>
    %99 = vector.shape_cast %95 : vector<2x8xf32> to vector<2x8x1xf32>
    %100 = vector.broadcast %99 : vector<2x8x1xf32> to vector<2x8x32xf32>
    %101 = arith.mulf %8, %100 : vector<2x8x32xf32>
    %cst_45 = arith.constant dense<0.000000e+00> : vector<2x32xf32>
    %102 = vector.multi_reduction <add>, %101, %cst_45 [1] : vector<2x8x32xf32> to vector<2x32xf32>
    %103 = arith.index_cast %c0_i32 : i32 to index
    %c0_46 = arith.constant 0 : index
    %c0_47 = arith.constant 0 : index
    %104 = vector.load %arg15[%103, %c0_46, %c0_47] : memref<4x2x8xf32, #tpu.memory_space<vmem>>, vector<1x2x8xf32>
    %105 = vector.shape_cast %104 : vector<1x2x8xf32> to vector<2x8xf32>
    %106 = vector.shape_cast %73 : vector<2x8xf32> to vector<1x2x8xf32>
    tpu.vector_store %arg15[%103, %c0_46, %c0_47], %106 {strides = array<i32>} : memref<4x2x8xf32, #tpu.memory_space<vmem>>, vector<1x2x8xf32>,
    %c1_i32 = arith.constant 1 : i32
    %107 = tpu.concatenate %102, %82 in 1 : vector<2x32xf32>, vector<2x32xf32> -> vector<2x64xf32>
    %cst_48 = arith.constant dense<0.000000e+00> : vector<2x128xf32>
    %108 = tpu.matmul %107, %9, %cst_48 {dimension_numbers = #tpu.dot_dimension_numbers<[1], [0], [0], [1], [0, 0, 1, 1], [], []>} : vector<2x64xf32>, vector<64x128xf32>, vector<2x128xf32> -> vector<2x128xf32>
    %109 = vector.broadcast %10 : vector<1x128xf32> to vector<2x128xf32>
    %110 = arith.addf %108, %109 : vector<2x128xf32>
    %111 = vector.extract_strided_slice %110 {offsets = [0, 0], sizes = [2, 32], strides = [1, 1]} : vector<2x128xf32> to vector<2x32xf32>
    %112 = arith.negf %111 : vector<2x32xf32>
    %113 = math.exp %112 : vector<2x32xf32>
    %cst_49 = arith.constant 1.000000e+00 : f32
    %114 = vector.broadcast %cst_49 : f32 to vector<2x32xf32>
    %115 = arith.addf %114, %113 : vector<2x32xf32>
    %116 = arith.divf %114, %115 : vector<2x32xf32>
    %117 = vector.extract_strided_slice %110 {offsets = [0, 32], sizes = [2, 32], strides = [1, 1]} : vector<2x128xf32> to vector<2x32xf32>
    %118 = arith.negf %117 : vector<2x32xf32>
    %119 = math.exp %118 : vector<2x32xf32>
    %cst_50 = arith.constant 1.000000e+00 : f32
    %120 = vector.broadcast %cst_50 : f32 to vector<2x32xf32>
    %121 = arith.addf %120, %119 : vector<2x32xf32>
    %122 = arith.divf %120, %121 : vector<2x32xf32>
    %123 = vector.extract_strided_slice %110 {offsets = [0, 64], sizes = [2, 32], strides = [1, 1]} : vector<2x128xf32> to vector<2x32xf32>
    %124 = math.tanh %123 : vector<2x32xf32>
    %125 = vector.extract_strided_slice %110 {offsets = [0, 96], sizes = [2, 32], strides = [1, 1]} : vector<2x128xf32> to vector<2x32xf32>
    %126 = arith.negf %125 : vector<2x32xf32>
    %127 = math.exp %126 : vector<2x32xf32>
    %cst_51 = arith.constant 1.000000e+00 : f32
    %128 = vector.broadcast %cst_51 : f32 to vector<2x32xf32>
    %129 = arith.addf %128, %127 : vector<2x32xf32>
    %130 = arith.divf %128, %129 : vector<2x32xf32>
    %131 = arith.mulf %122, %47 : vector<2x32xf32>
    %132 = arith.mulf %116, %124 : vector<2x32xf32>
    %133 = arith.addf %131, %132 : vector<2x32xf32>
    %134 = math.tanh %133 : vector<2x32xf32>
    %135 = arith.mulf %130, %134 : vector<2x32xf32>
    %cst_52 = arith.constant dense<0.000000e+00> : vector<2x32xf32>
    %136 = tpu.matmul %135, %13, %cst_52 {dimension_numbers = #tpu.dot_dimension_numbers<[1], [0], [0], [1], [0, 0, 1, 1], [], []>} : vector<2x32xf32>, vector<32x32xf32>, vector<2x32xf32> -> vector<2x32xf32>
    %137 = vector.broadcast %14 : vector<1x32xf32> to vector<2x32xf32>
    %138 = arith.addf %136, %137 : vector<2x32xf32>
    %139 = vector.shape_cast %138 : vector<2x32xf32> to vector<2x1x32xf32>
    %140 = vector.broadcast %139 : vector<2x1x32xf32> to vector<2x8x32xf32>
    %141 = arith.addf %140, %7 : vector<2x8x32xf32>
    %142 = math.tanh %141 : vector<2x8x32xf32>
    %143 = vector.shape_cast %15 : vector<1x32xf32> to vector<1x1x32xf32>
    %144 = vector.broadcast %143 : vector<1x1x32xf32> to vector<2x8x32xf32>
    %145 = arith.mulf %142, %144 : vector<2x8x32xf32>
    %cst_53 = arith.constant dense<0.000000e+00> : vector<2x8xf32>
    %146 = vector.multi_reduction <add>, %145, %cst_53 [2] : vector<2x8x32xf32> to vector<2x8xf32>
    %cst_54 = arith.constant 0.000000e+00 : f32
    %147 = vector.broadcast %cst_54 : f32 to vector<2x8xf32>
    %148 = arith.cmpf oeq, %98, %147 : vector<2x8xf32>
    %cst_55 = arith.constant 0xFF800000 : f32
    %149 = vector.broadcast %cst_55 : f32 to vector<2x8xf32>
    %150 = arith.select %148, %149, %146 : vector<2x8xi1>, vector<2x8xf32>
    %cst_56 = arith.constant dense<0xFF800000> : vector<2xf32>
    %151 = vector.multi_reduction <maximumf>, %150, %cst_56 [1] : vector<2x8xf32> to vector<2xf32>
    %152 = vector.shape_cast %151 : vector<2xf32> to vector<2x1xf32>
    %153 = vector.broadcast %152 : vector<2x1xf32> to vector<2x8xf32>
    %154 = arith.subf %150, %153 : vector<2x8xf32>
    %155 = math.exp %154 : vector<2x8xf32>
    %cst_57 = arith.constant dense<0.000000e+00> : vector<2xf32>
    %156 = vector.multi_reduction <add>, %155, %cst_57 [1] : vector<2x8xf32> to vector<2xf32>
    %157 = vector.shape_cast %156 : vector<2xf32> to vector<2x1xf32>
    %158 = vector.broadcast %157 : vector<2x1xf32> to vector<2x8xf32>
    %159 = arith.divf %155, %158 : vector<2x8xf32>
    %160 = vector.shape_cast %159 : vector<2x8xf32> to vector<2x8x1xf32>
    %161 = vector.broadcast %160 : vector<2x8x1xf32> to vector<2x8x32xf32>
    %162 = arith.mulf %7, %161 : vector<2x8x32xf32>
    %cst_58 = arith.constant dense<0.000000e+00> : vector<2x32xf32>
    %163 = vector.multi_reduction <add>, %162, %cst_58 [1] : vector<2x8x32xf32> to vector<2x32xf32>
    %164 = tpu.concatenate %163, %135 in 1 : vector<2x32xf32>, vector<2x32xf32> -> vector<2x64xf32>
    %cst_59 = arith.constant dense<0.000000e+00> : vector<2x32xf32>
    %165 = tpu.matmul %164, %11, %cst_59 {dimension_numbers = #tpu.dot_dimension_numbers<[1], [0], [0], [1], [0, 0, 1, 1], [], []>} : vector<2x64xf32>, vector<64x32xf32>, vector<2x32xf32> -> vector<2x32xf32>
    %166 = vector.broadcast %12 : vector<1x32xf32> to vector<2x32xf32>
    %167 = arith.addf %165, %166 : vector<2x32xf32>
    %168 = math.tanh %167 : vector<2x32xf32>
    %169 = arith.mulf %159, %98 : vector<2x8xf32>
    %cst_60 = arith.constant dense<0xFF800000> : vector<2xf32>
    %170 = vector.multi_reduction <maximumf>, %169, %cst_60 [1] : vector<2x8xf32> to vector<2xf32>
    %171 = vector.shape_cast %170 : vector<2xf32> to vector<2x1xf32>
    %172 = vector.broadcast %171 : vector<2x1xf32> to vector<2x8xf32>
    %173 = arith.cmpf oeq, %169, %172 : vector<2x8xf32>
    %c8_i32_61 = arith.constant 8 : i32
    %174 = vector.broadcast %c8_i32_61 : i32 to vector<2x8xi32>
    %175 = arith.select %173, %16, %174 : vector<2x8xi1>, vector<2x8xi32>
    %cst_62 = arith.constant dense<2147483647> : vector<2xi32>
    %176 = vector.multi_reduction <minsi>, %175, %cst_62 [1] : vector<2x8xi32> to vector<2xi32>
    %177 = vector.shape_cast %176 : vector<2xi32> to vector<2x1xi32>
    %178 = vector.broadcast %177 : vector<2x1xi32> to vector<2x8xi32>
    %179 = arith.cmpi eq, %16, %178 : vector<2x8xi32>
    %180 = arith.extui %179 : vector<2x8xi1> to vector<2x8xi32>
    %181 = arith.sitofp %180 : vector<2x8xi32> to vector<2x8xf32>
    %cst_63 = arith.constant 1.000000e+00 : f32
    %182 = vector.broadcast %cst_63 : f32 to vector<2x8xf32>
    %183 = arith.subf %182, %181 : vector<2x8xf32>
    %184 = arith.mulf %98, %183 : vector<2x8xf32>
    %185 = vector.shape_cast %181 : vector<2x8xf32> to vector<2x8x1xf32>
    %186 = vector.broadcast %185 : vector<2x8x1xf32> to vector<2x8x32xf32>
    %187 = arith.mulf %8, %186 : vector<2x8x32xf32>
    %cst_64 = arith.constant dense<0.000000e+00> : vector<2x32xf32>
    %188 = vector.multi_reduction <add>, %187, %cst_64 [1] : vector<2x8x32xf32> to vector<2x32xf32>
    %189 = arith.index_cast %c1_i32 : i32 to index
    %c0_65 = arith.constant 0 : index
    %c0_66 = arith.constant 0 : index
    %190 = vector.load %arg15[%189, %c0_65, %c0_66] : memref<4x2x8xf32, #tpu.memory_space<vmem>>, vector<1x2x8xf32>
    %191 = vector.shape_cast %190 : vector<1x2x8xf32> to vector<2x8xf32>
    %192 = vector.shape_cast %159 : vector<2x8xf32> to vector<1x2x8xf32>
    tpu.vector_store %arg15[%189, %c0_65, %c0_66], %192 {strides = array<i32>} : memref<4x2x8xf32, #tpu.memory_space<vmem>>, vector<1x2x8xf32>,
    %c2_i32 = arith.constant 2 : i32
    %193 = tpu.concatenate %188, %168 in 1 : vector<2x32xf32>, vector<2x32xf32> -> vector<2x64xf32>
    %cst_67 = arith.constant dense<0.000000e+00> : vector<2x128xf32>
    %194 = tpu.matmul %193, %9, %cst_67 {dimension_numbers = #tpu.dot_dimension_numbers<[1], [0], [0], [1], [0, 0, 1, 1], [], []>} : vector<2x64xf32>, vector<64x128xf32>, vector<2x128xf32> -> vector<2x128xf32>
    %195 = vector.broadcast %10 : vector<1x128xf32> to vector<2x128xf32>
    %196 = arith.addf %194, %195 : vector<2x128xf32>
    %197 = vector.extract_strided_slice %196 {offsets = [0, 0], sizes = [2, 32], strides = [1, 1]} : vector<2x128xf32> to vector<2x32xf32>
    %198 = arith.negf %197 : vector<2x32xf32>
    %199 = math.exp %198 : vector<2x32xf32>
    %cst_68 = arith.constant 1.000000e+00 : f32
    %200 = vector.broadcast %cst_68 : f32 to vector<2x32xf32>
    %201 = arith.addf %200, %199 : vector<2x32xf32>
    %202 = arith.divf %200, %201 : vector<2x32xf32>
    %203 = vector.extract_strided_slice %196 {offsets = [0, 32], sizes = [2, 32], strides = [1, 1]} : vector<2x128xf32> to vector<2x32xf32>
    %204 = arith.negf %203 : vector<2x32xf32>
    %205 = math.exp %204 : vector<2x32xf32>
    %cst_69 = arith.constant 1.000000e+00 : f32
    %206 = vector.broadcast %cst_69 : f32 to vector<2x32xf32>
    %207 = arith.addf %206, %205 : vector<2x32xf32>
    %208 = arith.divf %206, %207 : vector<2x32xf32>
    %209 = vector.extract_strided_slice %196 {offsets = [0, 64], sizes = [2, 32], strides = [1, 1]} : vector<2x128xf32> to vector<2x32xf32>
    %210 = math.tanh %209 : vector<2x32xf32>
    %211 = vector.extract_strided_slice %196 {offsets = [0, 96], sizes = [2, 32], strides = [1, 1]} : vector<2x128xf32> to vector<2x32xf32>
    %212 = arith.negf %211 : vector<2x32xf32>
    %213 = math.exp %212 : vector<2x32xf32>
    %cst_70 = arith.constant 1.000000e+00 : f32
    %214 = vector.broadcast %cst_70 : f32 to vector<2x32xf32>
    %215 = arith.addf %214, %213 : vector<2x32xf32>
    %216 = arith.divf %214, %215 : vector<2x32xf32>
    %217 = arith.mulf %208, %133 : vector<2x32xf32>
    %218 = arith.mulf %202, %210 : vector<2x32xf32>
    %219 = arith.addf %217, %218 : vector<2x32xf32>
    %220 = math.tanh %219 : vector<2x32xf32>
    %221 = arith.mulf %216, %220 : vector<2x32xf32>
    %cst_71 = arith.constant dense<0.000000e+00> : vector<2x32xf32>
    %222 = tpu.matmul %221, %13, %cst_71 {dimension_numbers = #tpu.dot_dimension_numbers<[1], [0], [0], [1], [0, 0, 1, 1], [], []>} : vector<2x32xf32>, vector<32x32xf32>, vector<2x32xf32> -> vector<2x32xf32>
    %223 = vector.broadcast %14 : vector<1x32xf32> to vector<2x32xf32>
    %224 = arith.addf %222, %223 : vector<2x32xf32>
    %225 = vector.shape_cast %224 : vector<2x32xf32> to vector<2x1x32xf32>
    %226 = vector.broadcast %225 : vector<2x1x32xf32> to vector<2x8x32xf32>
    %227 = arith.addf %226, %7 : vector<2x8x32xf32>
    %228 = math.tanh %227 : vector<2x8x32xf32>
    %229 = vector.shape_cast %15 : vector<1x32xf32> to vector<1x1x32xf32>
    %230 = vector.broadcast %229 : vector<1x1x32xf32> to vector<2x8x32xf32>
    %231 = arith.mulf %228, %230 : vector<2x8x32xf32>
    %cst_72 = arith.constant dense<0.000000e+00> : vector<2x8xf32>
    %232 = vector.multi_reduction <add>, %231, %cst_72 [2] : vector<2x8x32xf32> to vector<2x8xf32>
    %cst_73 = arith.constant 0.000000e+00 : f32
    %233 = vector.broadcast %cst_73 : f32 to vector<2x8xf32>
    %234 = arith.cmpf oeq, %184, %233 : vector<2x8xf32>
    %cst_74 = arith.constant 0xFF800000 : f32
    %235 = vector.broadcast %cst_74 : f32 to vector<2x8xf32>
    %236 = arith.select %234, %235, %232 : vector<2x8xi1>, vector<2x8xf32>
    %cst_75 = arith.constant dense<0xFF800000> : vector<2xf32>
    %237 = vector.multi_reduction <maximumf>, %236, %cst_75 [1] : vector<2x8xf32> to vector<2xf32>
    %238 = vector.shape_cast %237 : vector<2xf32> to vector<2x1xf32>
    %239 = vector.broadcast %238 : vector<2x1xf32> to vector<2x8xf32>
    %240 = arith.subf %236, %239 : vector<2x8xf32>
    %241 = math.exp %240 : vector<2x8xf32>
    %cst_76 = arith.constant dense<0.000000e+00> : vector<2xf32>
    %242 = vector.multi_reduction <add>, %241, %cst_76 [1] : vector<2x8xf32> to vector<2xf32>
    %243 = vector.shape_cast %242 : vector<2xf32> to vector<2x1xf32>
    %244 = vector.broadcast %243 : vector<2x1xf32> to vector<2x8xf32>
    %245 = arith.divf %241, %244 : vector<2x8xf32>
    %246 = vector.shape_cast %245 : vector<2x8xf32> to vector<2x8x1xf32>
    %247 = vector.broadcast %246 : vector<2x8x1xf32> to vector<2x8x32xf32>
    %248 = arith.mulf %7, %247 : vector<2x8x32xf32>
    %cst_77 = arith.constant dense<0.000000e+00> : vector<2x32xf32>
    %249 = vector.multi_reduction <add>, %248, %cst_77 [1] : vector<2x8x32xf32> to vector<2x32xf32>
    %250 = tpu.concatenate %249, %221 in 1 : vector<2x32xf32>, vector<2x32xf32> -> vector<2x64xf32>
    %cst_78 = arith.constant dense<0.000000e+00> : vector<2x32xf32>
    %251 = tpu.matmul %250, %11, %cst_78 {dimension_numbers = #tpu.dot_dimension_numbers<[1], [0], [0], [1], [0, 0, 1, 1], [], []>} : vector<2x64xf32>, vector<64x32xf32>, vector<2x32xf32> -> vector<2x32xf32>
    %252 = vector.broadcast %12 : vector<1x32xf32> to vector<2x32xf32>
    %253 = arith.addf %251, %252 : vector<2x32xf32>
    %254 = math.tanh %253 : vector<2x32xf32>
    %255 = arith.mulf %245, %184 : vector<2x8xf32>
    %cst_79 = arith.constant dense<0xFF800000> : vector<2xf32>
    %256 = vector.multi_reduction <maximumf>, %255, %cst_79 [1] : vector<2x8xf32> to vector<2xf32>
    %257 = vector.shape_cast %256 : vector<2xf32> to vector<2x1xf32>
    %258 = vector.broadcast %257 : vector<2x1xf32> to vector<2x8xf32>
    %259 = arith.cmpf oeq, %255, %258 : vector<2x8xf32>
    %c8_i32_80 = arith.constant 8 : i32
    %260 = vector.broadcast %c8_i32_80 : i32 to vector<2x8xi32>
    %261 = arith.select %259, %16, %260 : vector<2x8xi1>, vector<2x8xi32>
    %cst_81 = arith.constant dense<2147483647> : vector<2xi32>
    %262 = vector.multi_reduction <minsi>, %261, %cst_81 [1] : vector<2x8xi32> to vector<2xi32>
    %263 = vector.shape_cast %262 : vector<2xi32> to vector<2x1xi32>
    %264 = vector.broadcast %263 : vector<2x1xi32> to vector<2x8xi32>
    %265 = arith.cmpi eq, %16, %264 : vector<2x8xi32>
    %266 = arith.extui %265 : vector<2x8xi1> to vector<2x8xi32>
    %267 = arith.sitofp %266 : vector<2x8xi32> to vector<2x8xf32>
    %cst_82 = arith.constant 1.000000e+00 : f32
    %268 = vector.broadcast %cst_82 : f32 to vector<2x8xf32>
    %269 = arith.subf %268, %267 : vector<2x8xf32>
    %270 = arith.mulf %184, %269 : vector<2x8xf32>
    %271 = vector.shape_cast %267 : vector<2x8xf32> to vector<2x8x1xf32>
    %272 = vector.broadcast %271 : vector<2x8x1xf32> to vector<2x8x32xf32>
    %273 = arith.mulf %8, %272 : vector<2x8x32xf32>
    %cst_83 = arith.constant dense<0.000000e+00> : vector<2x32xf32>
    %274 = vector.multi_reduction <add>, %273, %cst_83 [1] : vector<2x8x32xf32> to vector<2x32xf32>
    %275 = arith.index_cast %c2_i32 : i32 to index
    %c0_84 = arith.constant 0 : index
    %c0_85 = arith.constant 0 : index
    %276 = vector.load %arg15[%275, %c0_84, %c0_85] : memref<4x2x8xf32, #tpu.memory_space<vmem>>, vector<1x2x8xf32>
    %277 = vector.shape_cast %276 : vector<1x2x8xf32> to vector<2x8xf32>
    %278 = vector.shape_cast %245 : vector<2x8xf32> to vector<1x2x8xf32>
    tpu.vector_store %arg15[%275, %c0_84, %c0_85], %278 {strides = array<i32>} : memref<4x2x8xf32, #tpu.memory_space<vmem>>, vector<1x2x8xf32>,
    %c3_i32 = arith.constant 3 : i32
    %279 = tpu.concatenate %274, %254 in 1 : vector<2x32xf32>, vector<2x32xf32> -> vector<2x64xf32>
    %cst_86 = arith.constant dense<0.000000e+00> : vector<2x128xf32>
    %280 = tpu.matmul %279, %9, %cst_86 {dimension_numbers = #tpu.dot_dimension_numbers<[1], [0], [0], [1], [0, 0, 1, 1], [], []>} : vector<2x64xf32>, vector<64x128xf32>, vector<2x128xf32> -> vector<2x128xf32>
    %281 = vector.broadcast %10 : vector<1x128xf32> to vector<2x128xf32>
    %282 = arith.addf %280, %281 : vector<2x128xf32>
    %283 = vector.extract_strided_slice %282 {offsets = [0, 0], sizes = [2, 32], strides = [1, 1]} : vector<2x128xf32> to vector<2x32xf32>
    %284 = arith.negf %283 : vector<2x32xf32>
    %285 = math.exp %284 : vector<2x32xf32>
    %cst_87 = arith.constant 1.000000e+00 : f32
    %286 = vector.broadcast %cst_87 : f32 to vector<2x32xf32>
    %287 = arith.addf %286, %285 : vector<2x32xf32>
    %288 = arith.divf %286, %287 : vector<2x32xf32>
    %289 = vector.extract_strided_slice %282 {offsets = [0, 32], sizes = [2, 32], strides = [1, 1]} : vector<2x128xf32> to vector<2x32xf32>
    %290 = arith.negf %289 : vector<2x32xf32>
    %291 = math.exp %290 : vector<2x32xf32>
    %cst_88 = arith.constant 1.000000e+00 : f32
    %292 = vector.broadcast %cst_88 : f32 to vector<2x32xf32>
    %293 = arith.addf %292, %291 : vector<2x32xf32>
    %294 = arith.divf %292, %293 : vector<2x32xf32>
    %295 = vector.extract_strided_slice %282 {offsets = [0, 64], sizes = [2, 32], strides = [1, 1]} : vector<2x128xf32> to vector<2x32xf32>
    %296 = math.tanh %295 : vector<2x32xf32>
    %297 = vector.extract_strided_slice %282 {offsets = [0, 96], sizes = [2, 32], strides = [1, 1]} : vector<2x128xf32> to vector<2x32xf32>
    %298 = arith.negf %297 : vector<2x32xf32>
    %299 = math.exp %298 : vector<2x32xf32>
    %cst_89 = arith.constant 1.000000e+00 : f32
    %300 = vector.broadcast %cst_89 : f32 to vector<2x32xf32>
    %301 = arith.addf %300, %299 : vector<2x32xf32>
    %302 = arith.divf %300, %301 : vector<2x32xf32>
    %303 = arith.mulf %294, %219 : vector<2x32xf32>
    %304 = arith.mulf %288, %296 : vector<2x32xf32>
    %305 = arith.addf %303, %304 : vector<2x32xf32>
    %306 = math.tanh %305 : vector<2x32xf32>
    %307 = arith.mulf %302, %306 : vector<2x32xf32>
    %cst_90 = arith.constant dense<0.000000e+00> : vector<2x32xf32>
    %308 = tpu.matmul %307, %13, %cst_90 {dimension_numbers = #tpu.dot_dimension_numbers<[1], [0], [0], [1], [0, 0, 1, 1], [], []>} : vector<2x32xf32>, vector<32x32xf32>, vector<2x32xf32> -> vector<2x32xf32>
    %309 = vector.broadcast %14 : vector<1x32xf32> to vector<2x32xf32>
    %310 = arith.addf %308, %309 : vector<2x32xf32>
    %311 = vector.shape_cast %310 : vector<2x32xf32> to vector<2x1x32xf32>
    %312 = vector.broadcast %311 : vector<2x1x32xf32> to vector<2x8x32xf32>
    %313 = arith.addf %312, %7 : vector<2x8x32xf32>
    %314 = math.tanh %313 : vector<2x8x32xf32>
    %315 = vector.shape_cast %15 : vector<1x32xf32> to vector<1x1x32xf32>
    %316 = vector.broadcast %315 : vector<1x1x32xf32> to vector<2x8x32xf32>
    %317 = arith.mulf %314, %316 : vector<2x8x32xf32>
    %cst_91 = arith.constant dense<0.000000e+00> : vector<2x8xf32>
    %318 = vector.multi_reduction <add>, %317, %cst_91 [2] : vector<2x8x32xf32> to vector<2x8xf32>
    %cst_92 = arith.constant 0.000000e+00 : f32
    %319 = vector.broadcast %cst_92 : f32 to vector<2x8xf32>
    %320 = arith.cmpf oeq, %270, %319 : vector<2x8xf32>
    %cst_93 = arith.constant 0xFF800000 : f32
    %321 = vector.broadcast %cst_93 : f32 to vector<2x8xf32>
    %322 = arith.select %320, %321, %318 : vector<2x8xi1>, vector<2x8xf32>
    %cst_94 = arith.constant dense<0xFF800000> : vector<2xf32>
    %323 = vector.multi_reduction <maximumf>, %322, %cst_94 [1] : vector<2x8xf32> to vector<2xf32>
    %324 = vector.shape_cast %323 : vector<2xf32> to vector<2x1xf32>
    %325 = vector.broadcast %324 : vector<2x1xf32> to vector<2x8xf32>
    %326 = arith.subf %322, %325 : vector<2x8xf32>
    %327 = math.exp %326 : vector<2x8xf32>
    %cst_95 = arith.constant dense<0.000000e+00> : vector<2xf32>
    %328 = vector.multi_reduction <add>, %327, %cst_95 [1] : vector<2x8xf32> to vector<2xf32>
    %329 = vector.shape_cast %328 : vector<2xf32> to vector<2x1xf32>
    %330 = vector.broadcast %329 : vector<2x1xf32> to vector<2x8xf32>
    %331 = arith.divf %327, %330 : vector<2x8xf32>
    %332 = vector.shape_cast %331 : vector<2x8xf32> to vector<2x8x1xf32>
    %333 = vector.broadcast %332 : vector<2x8x1xf32> to vector<2x8x32xf32>
    %334 = arith.mulf %7, %333 : vector<2x8x32xf32>
    %cst_96 = arith.constant dense<0.000000e+00> : vector<2x32xf32>
    %335 = vector.multi_reduction <add>, %334, %cst_96 [1] : vector<2x8x32xf32> to vector<2x32xf32>
    %336 = tpu.concatenate %335, %307 in 1 : vector<2x32xf32>, vector<2x32xf32> -> vector<2x64xf32>
    %cst_97 = arith.constant dense<0.000000e+00> : vector<2x32xf32>
    %337 = tpu.matmul %336, %11, %cst_97 {dimension_numbers = #tpu.dot_dimension_numbers<[1], [0], [0], [1], [0, 0, 1, 1], [], []>} : vector<2x64xf32>, vector<64x32xf32>, vector<2x32xf32> -> vector<2x32xf32>
    %338 = vector.broadcast %12 : vector<1x32xf32> to vector<2x32xf32>
    %339 = arith.addf %337, %338 : vector<2x32xf32>
    %340 = math.tanh %339 : vector<2x32xf32>
    %341 = arith.mulf %331, %270 : vector<2x8xf32>
    %cst_98 = arith.constant dense<0xFF800000> : vector<2xf32>
    %342 = vector.multi_reduction <maximumf>, %341, %cst_98 [1] : vector<2x8xf32> to vector<2xf32>
    %343 = vector.shape_cast %342 : vector<2xf32> to vector<2x1xf32>
    %344 = vector.broadcast %343 : vector<2x1xf32> to vector<2x8xf32>
    %345 = arith.cmpf oeq, %341, %344 : vector<2x8xf32>
    %c8_i32_99 = arith.constant 8 : i32
    %346 = vector.broadcast %c8_i32_99 : i32 to vector<2x8xi32>
    %347 = arith.select %345, %16, %346 : vector<2x8xi1>, vector<2x8xi32>
    %cst_100 = arith.constant dense<2147483647> : vector<2xi32>
    %348 = vector.multi_reduction <minsi>, %347, %cst_100 [1] : vector<2x8xi32> to vector<2xi32>
    %349 = vector.shape_cast %348 : vector<2xi32> to vector<2x1xi32>
    %350 = vector.broadcast %349 : vector<2x1xi32> to vector<2x8xi32>
    %351 = arith.cmpi eq, %16, %350 : vector<2x8xi32>
    %352 = arith.extui %351 : vector<2x8xi1> to vector<2x8xi32>
    %353 = arith.sitofp %352 : vector<2x8xi32> to vector<2x8xf32>
    %cst_101 = arith.constant 1.000000e+00 : f32
    %354 = vector.broadcast %cst_101 : f32 to vector<2x8xf32>
    %355 = arith.subf %354, %353 : vector<2x8xf32>
    %356 = arith.mulf %270, %355 : vector<2x8xf32>
    %357 = vector.shape_cast %353 : vector<2x8xf32> to vector<2x8x1xf32>
    %358 = vector.broadcast %357 : vector<2x8x1xf32> to vector<2x8x32xf32>
    %359 = arith.mulf %8, %358 : vector<2x8x32xf32>
    %cst_102 = arith.constant dense<0.000000e+00> : vector<2x32xf32>
    %360 = vector.multi_reduction <add>, %359, %cst_102 [1] : vector<2x8x32xf32> to vector<2x32xf32>
    %361 = arith.index_cast %c3_i32 : i32 to index
    %c0_103 = arith.constant 0 : index
    %c0_104 = arith.constant 0 : index
    %362 = vector.load %arg15[%361, %c0_103, %c0_104] : memref<4x2x8xf32, #tpu.memory_space<vmem>>, vector<1x2x8xf32>
    %363 = vector.shape_cast %362 : vector<1x2x8xf32> to vector<2x8xf32>
    %364 = vector.shape_cast %331 : vector<2x8xf32> to vector<1x2x8xf32>
    tpu.vector_store %arg15[%361, %c0_103, %c0_104], %364 {strides = array<i32>} : memref<4x2x8xf32, #tpu.memory_space<vmem>>, vector<1x2x8xf32>,
    %c4_i32 = arith.constant 4 : i32
    %c0_105 = arith.constant 0 : index
    %c0_106 = arith.constant 0 : index
    %365 = vector.load %arg16[%c0_105, %c0_106] : memref<2x32xf32, #tpu.memory_space<vmem>>, vector<2x32xf32>
    tpu.vector_store %arg16[%c0_105, %c0_106], %340 {strides = array<i32>} : memref<2x32xf32, #tpu.memory_space<vmem>>, vector<2x32xf32>,
    %c0_107 = arith.constant 0 : index
    %c0_108 = arith.constant 0 : index
    %366 = vector.load %arg17[%c0_107, %c0_108] : memref<2x32xf32, #tpu.memory_space<vmem>>, vector<2x32xf32>
    tpu.vector_store %arg17[%c0_107, %c0_108], %305 {strides = array<i32>} : memref<2x32xf32, #tpu.memory_space<vmem>>, vector<2x32xf32>,
    return
  }
  func.func @transform_0(%arg0: i32) -> (i32, i32, i32) {
    %c0_i32 = arith.constant 0 : i32
    %c0_i32_0 = arith.constant 0 : i32
    %c0_i32_1 = arith.constant 0 : i32
    return %arg0, %c0_i32, %c0_i32_0 : i32, i32, i32
  }
  func.func @transform_1(%arg0: i32) -> (i32, i32) {
    %c0_i32 = arith.constant 0 : i32
    %c0_i32_0 = arith.constant 0 : i32
    return %arg0, %c0_i32 : i32, i32
  }
  func.func @transform_2(%arg0: i32) -> (i32, i32) {
    %c0_i32 = arith.constant 0 : i32
    %c0_i32_0 = arith.constant 0 : i32
    return %arg0, %c0_i32 : i32, i32
  }
  func.func @transform_3(%arg0: i32) -> (i32, i32) {
    %c0_i32 = arith.constant 0 : i32
    %c0_i32_0 = arith.constant 0 : i32
    return %arg0, %c0_i32 : i32, i32
  }
  func.func @transform_4(%arg0: i32) -> (i32, i32, i32) {
    %c0_i32 = arith.constant 0 : i32
    %c0_i32_0 = arith.constant 0 : i32
    %c0_i32_1 = arith.constant 0 : i32
    return %arg0, %c0_i32, %c0_i32_0 : i32, i32, i32
  }
  func.func @transform_5(%arg0: i32) -> (i32, i32) {
    %c0_i32 = arith.constant 0 : i32
    %c0_i32_0 = arith.constant 0 : i32
    %c0_i32_1 = arith.constant 0 : i32
    return %c0_i32, %c0_i32_0 : i32, i32
  }
  func.func @transform_6(%arg0: i32) -> (i32, i32) {
    %c0_i32 = arith.constant 0 : i32
    %c0_i32_0 = arith.constant 0 : i32
    %c0_i32_1 = arith.constant 0 : i32
    return %c0_i32, %c0_i32_0 : i32, i32
  }
  func.func @transform_7(%arg0: i32) -> (i32, i32) {
    %c0_i32 = arith.constant 0 : i32
    %c0_i32_0 = arith.constant 0 : i32
    %c0_i32_1 = arith.constant 0 : i32
    return %c0_i32, %c0_i32_0 : i32, i32
  }
  func.func @transform_8(%arg0: i32) -> (i32, i32) {
    %c0_i32 = arith.constant 0 : i32
    %c0_i32_0 = arith.constant 0 : i32
    %c0_i32_1 = arith.constant 0 : i32
    return %c0_i32, %c0_i32_0 : i32, i32
  }
  func.func @transform_9(%arg0: i32) -> (i32, i32) {
    %c0_i32 = arith.constant 0 : i32
    %c0_i32_0 = arith.constant 0 : i32
    %c0_i32_1 = arith.constant 0 : i32
    return %c0_i32, %c0_i32_0 : i32, i32
  }
  func.func @transform_10(%arg0: i32) -> (i32, i32) {
    %c0_i32 = arith.constant 0 : i32
    %c0_i32_0 = arith.constant 0 : i32
    %c0_i32_1 = arith.constant 0 : i32
    return %c0_i32, %c0_i32_0 : i32, i32
  }
  func.func @transform_11(%arg0: i32) -> (i32, i32) {
    %c0_i32 = arith.constant 0 : i32
    %c0_i32_0 = arith.constant 0 : i32
    %c0_i32_1 = arith.constant 0 : i32
    return %c0_i32, %c0_i32_0 : i32, i32
  }
  func.func @transform_12(%arg0: i32) -> (i32, i32) {
    %c0_i32 = arith.constant 0 : i32
    %c0_i32_0 = arith.constant 0 : i32
    %c0_i32_1 = arith.constant 0 : i32
    return %c0_i32, %c0_i32_0 : i32, i32
  }
  func.func @transform_13(%arg0: i32) -> (i32, i32) {
    %c0_i32 = arith.constant 0 : i32
    %c0_i32_0 = arith.constant 0 : i32
    %c0_i32_1 = arith.constant 0 : i32
    return %c0_i32, %c0_i32_0 : i32, i32
  }
  func.func @transform_14(%arg0: i32) -> (i32, i32, i32) {
    %c0_i32 = arith.constant 0 : i32
    %c0_i32_0 = arith.constant 0 : i32
    %c0_i32_1 = arith.constant 0 : i32
    return %c0_i32, %arg0, %c0_i32_0 : i32, i32, i32
  }
  func.func @transform_15(%arg0: i32) -> (i32, i32) {
    %c0_i32 = arith.constant 0 : i32
    %c0_i32_0 = arith.constant 0 : i32
    return %arg0, %c0_i32 : i32, i32
  }
  func.func @transform_16(%arg0: i32) -> (i32, i32) {
    %c0_i32 = arith.constant 0 : i32
    %c0_i32_0 = arith.constant 0 : i32
    return %arg0, %c0_i32 : i32, i32
  }
}

</mosaic_0001>

<llo_original>
// kernel: tpu_custom_call.1
$region0: #{tpu_custom_call.1}
  #allocation0 [shape = 'u32[]', space=smem, size = 0x4, offset = 0x4, fixed_abs, tag = 'smem constant byte address 0x4 - core index']
  #allocation1 [shape = 'u32[72,128]{1,0:T(1,128)}', space=vmem, size = 0x9000, scoped, tag = 'internal scratch']
  %s0 = inlined_call_operand.hbm [shape: f32[2,8,32], index: 0, kind: input, shape index: {}]
  %s1 = inlined_call_operand.vmem [shape: f32[2,32], index: 1, kind: input, shape index: {}]
  %s2 = inlined_call_operand.vmem [shape: f32[2,32], index: 2, kind: input, shape index: {}]
  %s3 = inlined_call_operand.hbm [shape: f32[2,32], index: 3, kind: input, shape index: {}]
  %s4 = inlined_call_operand.hbm [shape: f32[2,8,32], index: 4, kind: input, shape index: {}]
  %s5 = inlined_call_operand.vmem [shape: f32[64,128], index: 5, kind: input, shape index: {}]
  %s6 = inlined_call_operand.vmem [shape: f32[1,128], index: 6, kind: input, shape index: {}]
  %s7 = inlined_call_operand.vmem [shape: f32[64,32], index: 7, kind: input, shape index: {}]
  %s8 = inlined_call_operand.vmem [shape: f32[1,32], index: 8, kind: input, shape index: {}]
  %s9 = inlined_call_operand.vmem [shape: f32[32,32], index: 9, kind: input, shape index: {}]
  %s10 = inlined_call_operand.vmem [shape: f32[1,32], index: 10, kind: input, shape index: {}]
  %s11 = inlined_call_operand.hbm [shape: f32[32,32], index: 11, kind: input, shape index: {}]
  %s12 = inlined_call_operand.vmem [shape: f32[1,32], index: 12, kind: input, shape index: {}]
  %s13 = inlined_call_operand.vmem [shape: f32[1,32], index: 13, kind: input, shape index: {}]
  %s14 = inlined_call_operand.hbm [shape: f32[4,2,8], index: 14, kind: output, shape index: {0}]
  %s15 = inlined_call_operand.hbm [shape: f32[2,32], index: 15, kind: output, shape index: {1}]
  %s16 = inlined_call_operand.hbm [shape: f32[2,32], index: 16, kind: output, shape index: {2}]
  %17 = xla_tuple %s14, %s15, %s16
  %s18 = sld [smem:[#allocation0]]
  $region98: #{tpu_custom_call.1} parent=0
    _
  %s20 = ssub.s32 1, %s18
  %s21 = scalar_select 0, %s20, %s18
  $region1: #{tpu_custom_call.1} parent=0
    #allocation2 [shape = 'u8[8192]{0}', space=vmem, size = 0x2000, scoped, tag = 'input window, operand 0, single buffered']
    #allocation3 [shape = 's32[1]{0}', space=sflag, size = 0x4, scoped, tag = 'scoped memory for tpu_custom_call.1']
    #allocation4 [shape = 's32[1]{0}', space=sflag, size = 0x4, scoped, tag = 'scoped memory for tpu_custom_call.1']
    #allocation5 [shape = 'u8[1024]{0}', space=vmem, size = 0x400, scoped, tag = 'input window, operand 3, single buffered']
    #allocation6 [shape = 's32[1]{0}', space=sflag, size = 0x4, scoped, tag = 'scoped memory for tpu_custom_call.1']
    #allocation7 [shape = 'u8[8192]{0}', space=vmem, size = 0x2000, scoped, tag = 'input window, operand 4, single buffered']
    #allocation8 [shape = 'u8[16384]{0}', space=vmem, size = 0x4000, scoped, tag = 'input window, operand 11, single buffered']
    #allocation9 [shape = 's32[1]{0}', space=sflag, size = 0x4, scoped, tag = 'scoped memory for tpu_custom_call.1']
    #allocation10 [shape = 'u8[4096]{0}', space=vmem, size = 0x1000, scoped, tag = 'output window, operand 0, single buffered']
    #allocation11 [shape = 'u8[1024]{0}', space=vmem, size = 0x400, scoped, tag = 'output window, operand 1, single buffered']
    #allocation12 [shape = 's32[1]{0}', space=sflag, size = 0x4, scoped, tag = 'scoped memory for tpu_custom_call.1']
    #allocation13 [shape = 'u8[1024]{0}', space=vmem, size = 0x400, scoped, tag = 'output window, operand 2, single buffered']
    %22 = vsyncpa [#allocation3], 0
    %23 = vsyncpa [#allocation6], 0
    %24 = vsyncpa [#allocation9], 0
    %25 = vsyncpa [#allocation4], 0
    %26 = vsyncpa [#allocation12], 0
    // Predicated region
    $region2: #{tpu_custom_call.1} parent=1 // pred_check
      _
    $region3: #{tpu_custom_call.1} parent=1 // pred_check_branch
      %28 = sbr.rel (0) target = $region5
    $region4: #{tpu_custom_call.1} parent=1 // pred_region
      %30 = vsyncadd [#allocation3], 0
      %s31 = sshll.u32 %s0, 4
      %s32 = int_to_ptr.hbm [resolvable:$true] %s31
      %s33 = sshll.u32 [#allocation2], 4
      %s34 = int_to_ptr.vmem [resolvable:$true] %s33
      %39 = dma.hbm_to_vmem [thread:$0]  %s32, 256, %s34, [#allocation3], 128, 128, 8
    $region5: #{tpu_custom_call.1} parent=1 // pred_fallthru
      _
    // Predicated region
    $region6: #{tpu_custom_call.1} parent=1 // pred_check
      _
    $region7: #{tpu_custom_call.1} parent=1 // pred_check_branch
      %41 = sbr.rel (0) target = $region9
    $region8: #{tpu_custom_call.1} parent=1 // pred_region
      _
    $region9: #{tpu_custom_call.1} parent=1 // pred_fallthru
      _
    // Predicated region
    $region10: #{tpu_custom_call.1} parent=1 // pred_check
      _
    $region11: #{tpu_custom_call.1} parent=1 // pred_check_branch
      %43 = sbr.rel (0) target = $region13
    $region12: #{tpu_custom_call.1} parent=1 // pred_region
      _
    $region13: #{tpu_custom_call.1} parent=1 // pred_fallthru
      _
    // Predicated region
    $region14: #{tpu_custom_call.1} parent=1 // pred_check
      _
    $region15: #{tpu_custom_call.1} parent=1 // pred_check_branch
      %45 = sbr.rel (0) target = $region17
    $region16: #{tpu_custom_call.1} parent=1 // pred_region
      %47 = vsyncadd [#allocation6], 0
      %s49 = sshll.u32 %s3, 4
      %s50 = int_to_ptr.hbm [resolvable:$true] %s49
      %s51 = sshll.u32 [#allocation5], 4
      %s52 = int_to_ptr.vmem [resolvable:$true] %s51
      %54 = dma.hbm_to_vmem [thread:$0]  %s50, 32, %s52, [#allocation6]
    $region17: #{tpu_custom_call.1} parent=1 // pred_fallthru
      _
    // Predicated region
    $region18: #{tpu_custom_call.1} parent=1 // pred_check
      _
    $region19: #{tpu_custom_call.1} parent=1 // pred_check_branch
      %56 = sbr.rel (0) target = $region21
    $region20: #{tpu_custom_call.1} parent=1 // pred_region
      %58 = vsyncadd [#allocation6], 0
      %s59 = sshll.u32 %s4, 4
      %s60 = int_to_ptr.hbm [resolvable:$true] %s59
      %s61 = sshll.u32 [#allocation7], 4
      %s62 = int_to_ptr.vmem [resolvable:$true] %s61
      %67 = dma.hbm_to_vmem [thread:$0]  %s60, 256, %s62, [#allocation6], 128, 128, 8
    $region21: #{tpu_custom_call.1} parent=1 // pred_fallthru
      _
    // Predicated region
    $region22: #{tpu_custom_call.1} parent=1 // pred_check
      _
    $region23: #{tpu_custom_call.1} parent=1 // pred_check_branch
      %69 = sbr.rel (0) target = $region25
    $region24: #{tpu_custom_call.1} parent=1 // pred_region
      _
    $region25: #{tpu_custom_call.1} parent=1 // pred_fallthru
      _
    // Predicated region
    $region26: #{tpu_custom_call.1} parent=1 // pred_check
      _
    $region27: #{tpu_custom_call.1} parent=1 // pred_check_branch
      %71 = sbr.rel (0) target = $region29
    $region28: #{tpu_custom_call.1} parent=1 // pred_region
      _
    $region29: #{tpu_custom_call.1} parent=1 // pred_fallthru
      _
    // Predicated region
    $region30: #{tpu_custom_call.1} parent=1 // pred_check
      _
    $region31: #{tpu_custom_call.1} parent=1 // pred_check_branch
      %73 = sbr.rel (0) target = $region33
    $region32: #{tpu_custom_call.1} parent=1 // pred_region
      _
    $region33: #{tpu_custom_call.1} parent=1 // pred_fallthru
      _
    // Predicated region
    $region34: #{tpu_custom_call.1} parent=1 // pred_check
      _
    $region35: #{tpu_custom_call.1} parent=1 // pred_check_branch
      %75 = sbr.rel (0) target = $region37
    $region36: #{tpu_custom_call.1} parent=1 // pred_region
      _
    $region37: #{tpu_custom_call.1} parent=1 // pred_fallthru
      _
    // Predicated region
    $region38: #{tpu_custom_call.1} parent=1 // pred_check
      _
    $region39: #{tpu_custom_call.1} parent=1 // pred_check_branch
      %77 = sbr.rel (0) target = $region41
    $region40: #{tpu_custom_call.1} parent=1 // pred_region
      _
    $region41: #{tpu_custom_call.1} parent=1 // pred_fallthru
      _
    // Predicated region
    $region42: #{tpu_custom_call.1} parent=1 // pred_check
      _
    $region43: #{tpu_custom_call.1} parent=1 // pred_check_branch
      %79 = sbr.rel (0) target = $region45
    $region44: #{tpu_custom_call.1} parent=1 // pred_region
      _
    $region45: #{tpu_custom_call.1} parent=1 // pred_fallthru
      _
    // Predicated region
    $region46: #{tpu_custom_call.1} parent=1 // pred_check
      _
    $region47: #{tpu_custom_call.1} parent=1 // pred_check_branch
      %81 = sbr.rel (0) target = $region49
    $region48: #{tpu_custom_call.1} parent=1 // pred_region
      %83 = vsyncadd [#allocation9], 0
      %s84 = sshll.u32 %s11, 4
      %s85 = int_to_ptr.hbm [resolvable:$true] %s84
      %s86 = sshll.u32 [#allocation8], 4
      %s87 = int_to_ptr.vmem [resolvable:$true] %s86
      %92 = dma.hbm_to_vmem [thread:$0]  %s85, 512, %s87, [#allocation9], 128, 128, 8
    $region49: #{tpu_custom_call.1} parent=1 // pred_fallthru
      _
    // Predicated region
    $region50: #{tpu_custom_call.1} parent=1 // pred_check
      _
    $region51: #{tpu_custom_call.1} parent=1 // pred_check_branch
      %94 = sbr.rel (0) target = $region53
    $region52: #{tpu_custom_call.1} parent=1 // pred_region
      _
    $region53: #{tpu_custom_call.1} parent=1 // pred_fallthru
      _
    // Predicated region
    $region54: #{tpu_custom_call.1} parent=1 // pred_check
      _
    $region55: #{tpu_custom_call.1} parent=1 // pred_check_branch
      %96 = sbr.rel (0) target = $region57
    $region56: #{tpu_custom_call.1} parent=1 // pred_region
      _
    $region57: #{tpu_custom_call.1} parent=1 // pred_fallthru
      _
    // Predicated region
    $region58: #{tpu_custom_call.1} parent=1 // pred_check
      _
    $region59: #{tpu_custom_call.1} parent=1 // pred_check_branch
      %98 = sbr.rel (0) target = $region61
    $region60: #{tpu_custom_call.1} parent=1 // pred_region
      %100 = dma.done [#allocation3], 256
    $region61: #{tpu_custom_call.1} parent=1 // pred_fallthru
      _
    // Predicated region
    $region62: #{tpu_custom_call.1} parent=1 // pred_check
      _
    $region63: #{tpu_custom_call.1} parent=1 // pred_check_branch
      %102 = sbr.rel (0) target = $region65
    $region64: #{tpu_custom_call.1} parent=1 // pred_region
      %104 = dma.done [#allocation6], 32
    $region65: #{tpu_custom_call.1} parent=1 // pred_fallthru
      _
    // Predicated region
    $region66: #{tpu_custom_call.1} parent=1 // pred_check
      _
    $region67: #{tpu_custom_call.1} parent=1 // pred_check_branch
      %106 = sbr.rel (0) target = $region69
    $region68: #{tpu_custom_call.1} parent=1 // pred_region
      %108 = dma.done [#allocation6], 256
    $region69: #{tpu_custom_call.1} parent=1 // pred_fallthru
      _
    // Predicated region
    $region70: #{tpu_custom_call.1} parent=1 // pred_check
      _
    $region71: #{tpu_custom_call.1} parent=1 // pred_check_branch
      %110 = sbr.rel (0) target = $region73
    $region72: #{tpu_custom_call.1} parent=1 // pred_region
      %112 = dma.done [#allocation9], 512
    $region73: #{tpu_custom_call.1} parent=1 // pred_fallthru
      _
    %v113 = vld [vmem:[#allocation7] sm:$0xff]
    %v114 = vld [vmem:[#allocation7 + $0x8] sm:$0xff]
    %v115 = vld [vmem:[#allocation8] sm:$0xff]
    %v116 = vld [vmem:[#allocation8 + $0x8] sm:$0xff]
    %v117 = vld [vmem:[#allocation8 + $0x10] sm:$0xff]
    %v118 = vld [vmem:[#allocation8 + $0x18] sm:$0xff]
    %v119 = vld [vmem:[%s12] sm:$0x1]
    %v121 = vperm.slane %v119, 0
    %vm123 = vcmask 261120
    %v125 = vsel %vm123, %v113, 0
    %v128 = vsel %vm123, %v114, 0
    %130 = vmatpush.msra.mxu0 0.0
    %131 = vmatpush.msra.mxu0 0.0
    %132 = vmatpush.msra.mxu0 0.0
    %133 = vmatpush.msra.mxu0 0.0
    %134 = vmatpush.msra.mxu0 0.0
    %135 = vmatpush.msra.mxu0 0.0
    %136 = vmatpush.msra.mxu0 0.0
    %137 = vmatpush.msra.mxu0 0.0
    %138 = vmatpush.msra.mxu0 0.0
    %139 = vmatpush.msra.mxu0 0.0
    %140 = vmatpush.msra.mxu0 0.0
    %141 = vmatpush.msra.mxu0 0.0
    %142 = vmatpush.msra.mxu0 %v118
    %143 = vmatpush.msra.mxu0 %v117
    %144 = vmatpush.msra.mxu0 %v116
    %145 = vmatpush.msra.mxu0 %v115
    %146 = vmatmul.f32.gmra.mxu0 %v125
    %v147 = vpop.f32.mrf.mxu0
    %v148 = vadd.f32 %v121, %v147
    %149 = vmatmul.f32.gmra.mxu0 %v128
    %v150 = vpop.f32.mrf.mxu0
    %v151 = vadd.f32 %v121, %v150
    %152 = vdwg.mxu0
    %v153 = vld [vmem:[#allocation2] sm:$0xff]
    %v154 = vld [vmem:[#allocation2 + $0x8] sm:$0xff]
    %v155 = vld [vmem:[%s5] sm:$0xff]
    %v156 = vld [vmem:[%s5 + $0x8] sm:$0xff]
    %v157 = vld [vmem:[%s5 + $0x10] sm:$0xff]
    %v158 = vld [vmem:[%s5 + $0x18] sm:$0xff]
    %v159 = vld [vmem:[%s5 + $0x20] sm:$0xff]
    %v160 = vld [vmem:[%s5 + $0x28] sm:$0xff]
    %v161 = vld [vmem:[%s5 + $0x30] sm:$0xff]
    %v162 = vld [vmem:[%s5 + $0x38] sm:$0xff]
    %v163 = vld [vmem:[%s6] sm:$0x1]
    %v164 = vld [vmem:[%s7] sm:$0xff]
    %v165 = vld [vmem:[%s7 + $0x8] sm:$0xff]
    %v166 = vld [vmem:[%s7 + $0x10] sm:$0xff]
    %v167 = vld [vmem:[%s7 + $0x18] sm:$0xff]
    %v168 = vld [vmem:[%s7 + $0x20] sm:$0xff]
    %v169 = vld [vmem:[%s7 + $0x28] sm:$0xff]
    %v170 = vld [vmem:[%s7 + $0x30] sm:$0xff]
    %v171 = vld [vmem:[%s7 + $0x38] sm:$0xff]
    %v172 = vld [vmem:[%s8] sm:$0x1]
    %v173 = vld [vmem:[%s9] sm:$0xff]
    %v174 = vld [vmem:[%s9 + $0x8] sm:$0xff]
    %v175 = vld [vmem:[%s9 + $0x10] sm:$0xff]
    %v176 = vld [vmem:[%s9 + $0x18] sm:$0xff]
    %v177 = vld [vmem:[%s10] sm:$0x1]
    %v178 = vld [vmem:[%s13] sm:$0x1]
    %v179 = vlaneseq
    %v180 = vand.u32 %v179, 127
    %v181 = vld [vmem:[%s1] sm:$0x3]
    %v182 = vld [vmem:[%s2] sm:$0x3]
    %v183 = vld [vmem:[#allocation5] sm:$0x3]
    %185 = vrot.lane.b32.xlu0 %v182, 32
    %v186 = vpop.permute.xlu0 %185
    %v188 = vsel %vm123, %v181, %v186
    %v190 = vperm.slane %v163, 0
    %vm192 = vcmask 523264
    %v194 = vsel %vm192, %v188, 0
    %196 = vmatpush.msra.mxu0 0.0
    %197 = vmatpush.msra.mxu0 0.0
    %198 = vmatpush.msra.mxu0 0.0
    %199 = vmatpush.msra.mxu0 0.0
    %200 = vmatpush.msra.mxu0 0.0
    %201 = vmatpush.msra.mxu0 0.0
    %202 = vmatpush.msra.mxu0 0.0
    %203 = vmatpush.msra.mxu0 0.0
    %204 = vmatpush.msra.mxu0 %v162
    %205 = vmatpush.msra.mxu0 %v161
    %206 = vmatpush.msra.mxu0 %v160
    %207 = vmatpush.msra.mxu0 %v159
    %208 = vmatpush.msra.mxu0 %v158
    %209 = vmatpush.msra.mxu0 %v157
    %210 = vmatpush.msra.mxu0 %v156
    %211 = vmatpush.msra.mxu0 %v155
    %212 = vmatmul.f32.gmra.mxu0 %v194
    %v213 = vpop.f32.mrf.mxu0
    %v214 = vadd.f32 %v190, %v213
    %215 = vdwg.mxu0
    %v216 = vxor.u32 %v214, 2147483648
    %v217 = vmul.f32 %v216, 1.442695
    %v218 = vpow.pop %v217
    %v219 = vadd.f32 %v218, 1.0
    %v220 = vrcp.pop %v219
    %v221 = vmul.f32 %v219, %v220
    %v222 = vsub.f32 1.0, %v221
    %v223 = vmul.f32 %v220, %v222
    %v224 = vadd.f32 %v220, %v223
    %vm225 = vweird.f32 %v219
    %vm226 = vweird.f32 %v220
    %vm227 = vmor %vm225, %vm226
    %v228 = vsel %vm227, %v220, %v224
    %v229 = vand.u32 2147483647, %v219
    %vm230 = vcmp.eq.f32.partialorder %v229, 8.507059e+37
    %v231 = vand.u32 %v219, 2147483648
    %v232 = vor.u32 1.1754944e-38, %v231
    %v233 = vsel %vm230, %v232, %v228
    %v234 = vmul.f32 1.0, %v233
    %v235 = vtanh.pop %v214
    %237 = vrot.lane.b32.xlu0 %v183, 32
    %v238 = vpop.permute.xlu0 %237
    %v240 = vmul.f32 %v234, %v238
    %242 = vrot.lane.b32.xlu0 %v235, 64
    %v243 = vpop.permute.xlu0 %242
    %v245 = vmul.f32 %v234, %v243
    %247 = vrot.lane.b32.xlu0 %v245, 32
    %v248 = vpop.permute.xlu0 %247
    %v250 = vadd.f32 %v240, %v248
    %v251 = vtanh.pop %v250
    %253 = vrot.lane.b32.xlu0 %v251, 64
    %v254 = vpop.permute.xlu0 %253
    %v256 = vmul.f32 %v234, %v254
    %v258 = vperm.slane %v177, 0
    %261 = vrot.lane.b32.xlu0 %v256, 32
    %v262 = vpop.permute.xlu0 %261
    %v263 = vsel %vm123, %v262, 0
    %265 = vmatpush.msra.mxu0 0.0
    %266 = vmatpush.msra.mxu0 0.0
    %267 = vmatpush.msra.mxu0 0.0
    %268 = vmatpush.msra.mxu0 0.0
    %269 = vmatpush.msra.mxu0 0.0
    %270 = vmatpush.msra.mxu0 0.0
    %271 = vmatpush.msra.mxu0 0.0
    %272 = vmatpush.msra.mxu0 0.0
    %273 = vmatpush.msra.mxu0 0.0
    %274 = vmatpush.msra.mxu0 0.0
    %275 = vmatpush.msra.mxu0 0.0
    %276 = vmatpush.msra.mxu0 0.0
    %277 = vmatpush.msra.mxu0 %v176
    %278 = vmatpush.msra.mxu0 %v175
    %279 = vmatpush.msra.mxu0 %v174
    %280 = vmatpush.msra.mxu0 %v173
    %281 = vmatmul.f32.gmra.mxu0 %v263
    %v282 = vpop.f32.mrf.mxu0
    %v283 = vadd.f32 %v258, %v282
    %284 = vdwg.mxu0
    %v286 = vrot.slane %v283, 1
    %v287 = vperm.slane %v283, 0
    %v288 = vperm.slane %v286, 0
    %v291 = vadd.f32 %v287, %v148
    %v292 = vadd.f32 %v288, %v151
    %v293 = vtanh.pop %v291
    %v294 = vtanh.pop %v292
    %v296 = vperm.slane %v178, 0
    %v298 = vmul.f32 %v293, %v296
    %v299 = vmul.f32 %v294, %v296
    %v300 = vsel %vm123, %v298, 0.0
    %301 = vadd.xlane.f32.xlu0 %v300
    %v302 = vpop.xlane.xlu0 %301
    %v303 = vsel %vm123, %v299, 0.0
    %304 = vadd.xlane.f32.xlu0 %v303
    %v305 = vpop.xlane.xlu0 %304
    %vm306 = vcmp.eq.f32.partialorder 1.0, 0.0
    %v307 = vsel %vm306, -inf, %v302
    %v308 = vsel %vm306, -inf, %v305
    %v311 = vperm.slane %v307, %v180
    %v312 = vperm.slane %v308, %v180
    %vm313 = vcmask 1041409
    %v314 = vsel %vm313, %v312, %v311
    %vm316 = vcmask 58368
    %v317 = vsel %vm316, %v314, -inf
    %318 = vmax.xlane.f32.xlu0 %v317
    %v319 = vpop.xlane.xlu0 %318
    %v321 = vperm.slane %v319, 0
    %v322 = vperm.slane %v319, 1
    %v325 = vsub.f32 %v307, %v321
    %v326 = vsub.f32 %v308, %v322
    %v327 = vmul.f32 %v325, 1.442695
    %v328 = vpow.pop %v327
    %v329 = vmul.f32 %v326, 1.442695
    %v330 = vpow.pop %v329
    %333 = vset.pattern.permute.xlu0 0
    %334 = vperm.xlu0 %333, %v328
    %v335 = vpop.permute.xlu0 %334
    %336 = vset.pattern.permute.xlu0 0
    %337 = vperm.xlu0 %336, %v330
    %v338 = vpop.permute.xlu0 %337
    %v339 = vperm.slane %v335, %v180
    %v340 = vperm.slane %v338, %v180
    %v341 = vsel %vm313, %v340, %v339
    %v343 = vsel %vm316, %v341, 0.0
    %344 = vadd.xlane.f32.xlu0 %v343
    %v345 = vpop.xlane.xlu0 %344
    %v347 = vperm.slane %v345, 0
    %v348 = vperm.slane %v345, 1
    %v351 = vrcp.pop %v347
    %v352 = vmul.f32 %v347, %v351
    %v353 = vsub.f32 1.0, %v352
    %v354 = vmul.f32 %v351, %v353
    %v355 = vadd.f32 %v351, %v354
    %vm356 = vweird.f32 %v347
    %vm357 = vweird.f32 %v351
    %vm358 = vmor %vm356, %vm357
    %v359 = vsel %vm358, %v351, %v355
    %v360 = vand.u32 2147483647, %v347
    %vm361 = vcmp.eq.f32.partialorder %v360, 8.507059e+37
    %v362 = vand.u32 %v347, 2147483648
    %v363 = vor.u32 1.1754944e-38, %v362
    %v364 = vsel %vm361, %v363, %v359
    %v365 = vmul.f32 %v328, %v364
    %v366 = vrcp.pop %v348
    %v367 = vmul.f32 %v348, %v366
    %v368 = vsub.f32 1.0, %v367
    %v369 = vmul.f32 %v366, %v368
    %v370 = vadd.f32 %v366, %v369
    %vm371 = vweird.f32 %v348
    %vm372 = vweird.f32 %v366
    %vm373 = vmor %vm371, %vm372
    %v374 = vsel %vm373, %v366, %v370
    %v375 = vand.u32 2147483647, %v348
    %vm376 = vcmp.eq.f32.partialorder %v375, 8.507059e+37
    %v377 = vand.u32 %v348, 2147483648
    %v378 = vor.u32 1.1754944e-38, %v377
    %v379 = vsel %vm376, %v378, %v374
    %v380 = vmul.f32 %v330, %v379
    %382 = vset.pattern.permute.xlu0 0
    %383 = vperm.xlu0 %382, %v365
    %v384 = vpop.permute.xlu0 %383
    %387 = vset.pattern.permute.xlu0 0
    %388 = vperm.xlu0 %387, %v380
    %v389 = vpop.permute.xlu0 %388
    %v391 = vmul.f32 %v148, %v384
    %v392 = vmul.f32 %v151, %v389
    %v393 = vsel %vm123, %v391, 0.0
    %v394 = vrot.slane %v393, 4
    %v395 = vadd.f32 %v393, %v394
    %v396 = vrot.slane %v395, 2
    %v397 = vadd.f32 %v395, %v396
    %v398 = vrot.slane %v397, 1
    %v399 = vadd.f32 %v397, %v398
    %v400 = vsel %vm123, %v392, 0.0
    %v401 = vrot.slane %v400, 4
    %v402 = vadd.f32 %v400, %v401
    %v403 = vrot.slane %v402, 2
    %v404 = vadd.f32 %v402, %v403
    %v405 = vrot.slane %v404, 1
    %v406 = vadd.f32 %v404, %v405
    %v409 = vsel %vm313, %v406, %v399
    %411 = vrot.lane.b32.xlu0 %v256, 64
    %v412 = vpop.permute.xlu0 %411
    %v414 = vsel %vm123, %v409, %v412
    %v416 = vperm.slane %v172, 0
    %v419 = vsel %vm192, %v414, 0
    %421 = vmatpush.msra.mxu0 0.0
    %422 = vmatpush.msra.mxu0 0.0
    %423 = vmatpush.msra.mxu0 0.0
    %424 = vmatpush.msra.mxu0 0.0
    %425 = vmatpush.msra.mxu0 0.0
    %426 = vmatpush.msra.mxu0 0.0
    %427 = vmatpush.msra.mxu0 0.0
    %428 = vmatpush.msra.mxu0 0.0
    %429 = vmatpush.msra.mxu0 %v171
    %430 = vmatpush.msra.mxu0 %v170
    %431 = vmatpush.msra.mxu0 %v169
    %432 = vmatpush.msra.mxu0 %v168
    %433 = vmatpush.msra.mxu0 %v167
    %434 = vmatpush.msra.mxu0 %v166
    %435 = vmatpush.msra.mxu0 %v165
    %436 = vmatpush.msra.mxu0 %v164
    %437 = vmatmul.f32.gmra.mxu0 %v419
    %v438 = vpop.f32.mrf.mxu0
    %v439 = vadd.f32 %v416, %v438
    %440 = vdwg.mxu0
    %v441 = vtanh.pop %v439
    %v442 = vperm.slane %v384, %v180
    %v443 = vperm.slane %v389, %v180
    %v444 = vsel %vm313, %v443, %v442
    %v446 = vsel %vm316, %v444, -inf
    %447 = vmax.xlane.f32.xlu0 %v446
    %v448 = vpop.xlane.xlu0 %447
    %v450 = vperm.slane %v448, 0
    %v451 = vperm.slane %v448, 1
    %vm454 = vcmp.eq.f32.partialorder %v365, %v450
    %vm455 = vcmp.eq.f32.partialorder %v380, %v451
    %v456 = vlaneseq
    %v457 = vshrl.u32 %v456, 7
    %459 = vset.pattern.permute.xlu0 %v457
    %460 = vperm.xlu0 %459, %v180
    %v461 = vpop.permute.xlu0 %460
    %v462 = vsel %vm454, %v461, 8
    %v463 = vsel %vm455, %v461, 8
    %464 = vset.pattern.permute.xlu0 0
    %465 = vperm.xlu0 %464, %v462
    %v466 = vpop.permute.xlu0 %465
    %467 = vset.pattern.permute.xlu0 0
    %468 = vperm.xlu0 %467, %v463
    %v469 = vpop.permute.xlu0 %468
    %v470 = vperm.slane %v466, %v180
    %v471 = vperm.slane %v469, %v180
    %v472 = vsel %vm313, %v471, %v470
    %v473 = vsel %vm316, %v472, 2147483647
    %v474 = vand.u32 %v473, 65535
    %v475 = vshra.s32 %v473, 16
    %v476 = vcvt.s32.f32 %v474
    %v477 = vcvt.s32.f32 %v475
    %478 = vmin.xlane.f32.xlu0 %v477
    %v479 = vpop.xlane.xlu0 %478
    %vm480 = vcmp.eq.f32.partialorder %v477, %v479
    %v481 = vsel %vm480, %v476, inf
    %482 = vmin.xlane.f32.xlu0 %v481
    %v483 = vpop.xlane.xlu0 %482
    %v484 = vcvt.f32.s32 %v483
    %v485 = vcvt.f32.s32 %v479
    %v486 = vshll.u32 %v485, 16
    %v487 = vadd.s32 %v486, %v484
    %vm488 = vcmp.eq.s32.totalorder %v180, %v487
    %v489 = vsel %vm488, 1, 0
    %v490 = vcvt.s32.f32 %v489
    %v491 = vsub.f32 1.0, %v490
    %v492 = vperm.slane %v490, 0
    %v493 = vlaneseq
    %v494 = vshrl.u32 %v493, 7
    %496 = vset.pattern.permute.xlu0 %v494
    %497 = vperm.xlu0 %496, %v492
    %v498 = vpop.permute.xlu0 %497
    %v499 = vperm.slane %v490, 1
    %v500 = vlaneseq
    %v501 = vshrl.u32 %v500, 7
    %503 = vset.pattern.permute.xlu0 %v501
    %504 = vperm.xlu0 %503, %v499
    %v505 = vpop.permute.xlu0 %504
    %v506 = vmul.f32 %v153, %v498
    %v507 = vmul.f32 %v154, %v505
    %v508 = vsel %vm123, %v506, 0.0
    %v509 = vrot.slane %v508, 4
    %v510 = vadd.f32 %v508, %v509
    %v511 = vrot.slane %v510, 2
    %v512 = vadd.f32 %v510, %v511
    %v513 = vrot.slane %v512, 1
    %v514 = vadd.f32 %v512, %v513
    %v515 = vsel %vm123, %v507, 0.0
    %v516 = vrot.slane %v515, 4
    %v517 = vadd.f32 %v515, %v516
    %v518 = vrot.slane %v517, 2
    %v519 = vadd.f32 %v517, %v518
    %v520 = vrot.slane %v519, 1
    %v521 = vadd.f32 %v519, %v520
    %522 = vst.msk [vmem:[#allocation10] sm:$0x3] %vm316, %v444
    %v525 = vsel %vm313, %v521, %v514
    %528 = vrot.lane.b32.xlu0 %v441, 32
    %v529 = vpop.permute.xlu0 %528
    %v531 = vsel %vm123, %v525, %v529
    %v533 = vsel %vm192, %v531, 0
    %535 = vmatpush.msra.mxu0 0.0
    %536 = vmatpush.msra.mxu0 0.0
    %537 = vmatpush.msra.mxu0 0.0
    %538 = vmatpush.msra.mxu0 0.0
    %539 = vmatpush.msra.mxu0 0.0
    %540 = vmatpush.msra.mxu0 0.0
    %541 = vmatpush.msra.mxu0 0.0
    %542 = vmatpush.msra.mxu0 0.0
    %543 = vmatpush.msra.mxu0 %v162
    %544 = vmatpush.msra.mxu0 %v161
    %545 = vmatpush.msra.mxu0 %v160
    %546 = vmatpush.msra.mxu0 %v159
    %547 = vmatpush.msra.mxu0 %v158
    %548 = vmatpush.msra.mxu0 %v157
    %549 = vmatpush.msra.mxu0 %v156
    %550 = vmatpush.msra.mxu0 %v155
    %551 = vmatmul.f32.gmra.mxu0 %v533
    %v552 = vpop.f32.mrf.mxu0
    %v553 = vadd.f32 %v190, %v552
    %554 = vdwg.mxu0
    %v555 = vxor.u32 %v553, 2147483648
    %v556 = vmul.f32 %v555, 1.442695
    %v557 = vpow.pop %v556
    %v558 = vadd.f32 %v557, 1.0
    %v559 = vrcp.pop %v558
    %v560 = vmul.f32 %v558, %v559
    %v561 = vsub.f32 1.0, %v560
    %v562 = vmul.f32 %v559, %v561
    %v563 = vadd.f32 %v559, %v562
    %vm564 = vweird.f32 %v558
    %vm565 = vweird.f32 %v559
    %vm566 = vmor %vm564, %vm565
    %v567 = vsel %vm566, %v559, %v563
    %v568 = vand.u32 2147483647, %v558
    %vm569 = vcmp.eq.f32.partialorder %v568, 8.507059e+37
    %v570 = vand.u32 %v558, 2147483648
    %v571 = vor.u32 1.1754944e-38, %v570
    %v572 = vsel %vm569, %v571, %v567
    %v573 = vmul.f32 1.0, %v572
    %v574 = vtanh.pop %v553
    %v575 = vmul.f32 %v573, %v250
    %577 = vrot.lane.b32.xlu0 %v574, 64
    %v578 = vpop.permute.xlu0 %577
    %v580 = vmul.f32 %v573, %v578
    %582 = vrot.lane.b32.xlu0 %v580, 32
    %v583 = vpop.permute.xlu0 %582
    %v585 = vadd.f32 %v575, %v583
    %v586 = vtanh.pop %v585
    %588 = vrot.lane.b32.xlu0 %v586, 64
    %v589 = vpop.permute.xlu0 %588
    %v591 = vmul.f32 %v573, %v589
    %593 = vrot.lane.b32.xlu0 %v591, 32
    %v594 = vpop.permute.xlu0 %593
    %v595 = vsel %vm123, %v594, 0
    %597 = vmatpush.msra.mxu0 0.0
    %598 = vmatpush.msra.mxu0 0.0
    %599 = vmatpush.msra.mxu0 0.0
    %600 = vmatpush.msra.mxu0 0.0
    %601 = vmatpush.msra.mxu0 0.0
    %602 = vmatpush.msra.mxu0 0.0
    %603 = vmatpush.msra.mxu0 0.0
    %604 = vmatpush.msra.mxu0 0.0
    %605 = vmatpush.msra.mxu0 0.0
    %606 = vmatpush.msra.mxu0 0.0
    %607 = vmatpush.msra.mxu0 0.0
    %608 = vmatpush.msra.mxu0 0.0
    %609 = vmatpush.msra.mxu0 %v176
    %610 = vmatpush.msra.mxu0 %v175
    %611 = vmatpush.msra.mxu0 %v174
    %612 = vmatpush.msra.mxu0 %v173
    %613 = vmatmul.f32.gmra.mxu0 %v595
    %v614 = vpop.f32.mrf.mxu0
    %v615 = vadd.f32 %v258, %v614
    %616 = vdwg.mxu0
    %v618 = vrot.slane %v615, 1
    %v619 = vperm.slane %v615, 0
    %v620 = vperm.slane %v618, 0
    %v623 = vadd.f32 %v619, %v148
    %v624 = vadd.f32 %v620, %v151
    %v625 = vtanh.pop %v623
    %v626 = vtanh.pop %v624
    %v627 = vmul.f32 %v625, %v296
    %v628 = vmul.f32 %v626, %v296
    %v629 = vsel %vm123, %v627, 0.0
    %630 = vadd.xlane.f32.xlu0 %v629
    %v631 = vpop.xlane.xlu0 %630
    %v632 = vsel %vm123, %v628, 0.0
    %633 = vadd.xlane.f32.xlu0 %v632
    %v634 = vpop.xlane.xlu0 %633
    %vm635 = vcmp.eq.f32.partialorder %v491, 0.0
    %v638 = vperm.slane %v631, %v180
    %v639 = vperm.slane %v634, %v180
    %v640 = vsel %vm313, %v639, %v638
    %v642 = vsel %vm635, -inf, %v640
    %v643 = vsel %vm316, %v642, -inf
    %644 = vmax.xlane.f32.xlu0 %v643
    %v645 = vpop.xlane.xlu0 %644
    %v646 = vsub.f32 %v642, %v645
    %v647 = vmul.f32 %v646, 1.442695
    %v648 = vpow.pop %v647
    %v649 = vsel %vm316, %v648, 0.0
    %650 = vadd.xlane.f32.xlu0 %v649
    %v651 = vpop.xlane.xlu0 %650
    %v652 = vrcp.pop %v651
    %v653 = vmul.f32 %v651, %v652
    %v654 = vsub.f32 1.0, %v653
    %v655 = vmul.f32 %v652, %v654
    %v656 = vadd.f32 %v652, %v655
    %vm657 = vweird.f32 %v651
    %vm658 = vweird.f32 %v652
    %vm659 = vmor %vm657, %vm658
    %v660 = vsel %vm659, %v652, %v656
    %v661 = vand.u32 2147483647, %v651
    %vm662 = vcmp.eq.f32.partialorder %v661, 8.507059e+37
    %v663 = vand.u32 %v651, 2147483648
    %v664 = vor.u32 1.1754944e-38, %v663
    %v665 = vsel %vm662, %v664, %v660
    %v666 = vmul.f32 %v648, %v665
    %v667 = vperm.slane %v666, 0
    %v668 = vlaneseq
    %v669 = vshrl.u32 %v668, 7
    %671 = vset.pattern.permute.xlu0 %v669
    %672 = vperm.xlu0 %671, %v667
    %v673 = vpop.permute.xlu0 %672
    %v674 = vperm.slane %v666, 1
    %v675 = vlaneseq
    %v676 = vshrl.u32 %v675, 7
    %678 = vset.pattern.permute.xlu0 %v676
    %679 = vperm.xlu0 %678, %v674
    %v680 = vpop.permute.xlu0 %679
    %v681 = vmul.f32 %v148, %v673
    %v682 = vmul.f32 %v151, %v680
    %v683 = vsel %vm123, %v681, 0.0
    %v684 = vrot.slane %v683, 4
    %v685 = vadd.f32 %v683, %v684
    %v686 = vrot.slane %v685, 2
    %v687 = vadd.f32 %v685, %v686
    %v688 = vrot.slane %v687, 1
    %v689 = vadd.f32 %v687, %v688
    %v690 = vsel %vm123, %v682, 0.0
    %v691 = vrot.slane %v690, 4
    %v692 = vadd.f32 %v690, %v691
    %v693 = vrot.slane %v692, 2
    %v694 = vadd.f32 %v692, %v693
    %v695 = vrot.slane %v694, 1
    %v696 = vadd.f32 %v694, %v695
    %v699 = vsel %vm313, %v696, %v689
    %701 = vrot.lane.b32.xlu0 %v591, 64
    %v702 = vpop.permute.xlu0 %701
    %v704 = vsel %vm123, %v699, %v702
    %v706 = vsel %vm192, %v704, 0
    %708 = vmatpush.msra.mxu0 0.0
    %709 = vmatpush.msra.mxu0 0.0
    %710 = vmatpush.msra.mxu0 0.0
    %711 = vmatpush.msra.mxu0 0.0
    %712 = vmatpush.msra.mxu0 0.0
    %713 = vmatpush.msra.mxu0 0.0
    %714 = vmatpush.msra.mxu0 0.0
    %715 = vmatpush.msra.mxu0 0.0
    %716 = vmatpush.msra.mxu0 %v171
    %717 = vmatpush.msra.mxu0 %v170
    %718 = vmatpush.msra.mxu0 %v169
    %719 = vmatpush.msra.mxu0 %v168
    %720 = vmatpush.msra.mxu0 %v167
    %721 = vmatpush.msra.mxu0 %v166
    %722 = vmatpush.msra.mxu0 %v165
    %723 = vmatpush.msra.mxu0 %v164
    %724 = vmatmul.f32.gmra.mxu0 %v706
    %v725 = vpop.f32.mrf.mxu0
    %v726 = vadd.f32 %v416, %v725
    %727 = vdwg.mxu0
    %v728 = vtanh.pop %v726
    %v729 = vmul.f32 %v666, %v491
    %v730 = vsel %vm316, %v729, -inf
    %731 = vmax.xlane.f32.xlu0 %v730
    %v732 = vpop.xlane.xlu0 %731
    %vm733 = vcmp.eq.f32.partialorder %v729, %v732
    %v734 = vsel %vm733, %v180, 8
    %v735 = vsel %vm316, %v734, 2147483647
    %v736 = vand.u32 %v735, 65535
    %v737 = vshra.s32 %v735, 16
    %v738 = vcvt.s32.f32 %v736
    %v739 = vcvt.s32.f32 %v737
    %740 = vmin.xlane.f32.xlu0 %v739
    %v741 = vpop.xlane.xlu0 %740
    %vm742 = vcmp.eq.f32.partialorder %v739, %v741
    %v743 = vsel %vm742, %v738, inf
    %744 = vmin.xlane.f32.xlu0 %v743
    %v745 = vpop.xlane.xlu0 %744
    %v746 = vcvt.f32.s32 %v745
    %v747 = vcvt.f32.s32 %v741
    %v748 = vshll.u32 %v747, 16
    %v749 = vadd.s32 %v748, %v746
    %vm750 = vcmp.eq.s32.totalorder %v180, %v749
    %v751 = vsel %vm750, 1, 0
    %v752 = vcvt.s32.f32 %v751
    %v753 = vsub.f32 1.0, %v752
    %v754 = vmul.f32 %v491, %v753
    %v755 = vperm.slane %v752, 0
    %v756 = vlaneseq
    %v757 = vshrl.u32 %v756, 7
    %759 = vset.pattern.permute.xlu0 %v757
    %760 = vperm.xlu0 %759, %v755
    %v761 = vpop.permute.xlu0 %760
    %v762 = vperm.slane %v752, 1
    %v763 = vlaneseq
    %v764 = vshrl.u32 %v763, 7
    %766 = vset.pattern.permute.xlu0 %v764
    %767 = vperm.xlu0 %766, %v762
    %v768 = vpop.permute.xlu0 %767
    %v769 = vmul.f32 %v153, %v761
    %v770 = vmul.f32 %v154, %v768
    %v771 = vsel %vm123, %v769, 0.0
    %v772 = vrot.slane %v771, 4
    %v773 = vadd.f32 %v771, %v772
    %v774 = vrot.slane %v773, 2
    %v775 = vadd.f32 %v773, %v774
    %v776 = vrot.slane %v775, 1
    %v777 = vadd.f32 %v775, %v776
    %v778 = vsel %vm123, %v770, 0.0
    %v779 = vrot.slane %v778, 4
    %v780 = vadd.f32 %v778, %v779
    %v781 = vrot.slane %v780, 2
    %v782 = vadd.f32 %v780, %v781
    %v783 = vrot.slane %v782, 1
    %v784 = vadd.f32 %v782, %v783
    %s785 = scalar_lea.vmem [#allocation10], 2
    %786 = vst.msk [vmem:[%s785] sm:$0x3] %vm316, %v666
    %v789 = vsel %vm313, %v784, %v777
    %792 = vrot.lane.b32.xlu0 %v728, 32
    %v793 = vpop.permute.xlu0 %792
    %v795 = vsel %vm123, %v789, %v793
    %v797 = vsel %vm192, %v795, 0
    %799 = vmatpush.msra.mxu0 0.0
    %800 = vmatpush.msra.mxu0 0.0
    %801 = vmatpush.msra.mxu0 0.0
    %802 = vmatpush.msra.mxu0 0.0
    %803 = vmatpush.msra.mxu0 0.0
    %804 = vmatpush.msra.mxu0 0.0
    %805 = vmatpush.msra.mxu0 0.0
    %806 = vmatpush.msra.mxu0 0.0
    %807 = vmatpush.msra.mxu0 %v162
    %808 = vmatpush.msra.mxu0 %v161
    %809 = vmatpush.msra.mxu0 %v160
    %810 = vmatpush.msra.mxu0 %v159
    %811 = vmatpush.msra.mxu0 %v158
    %812 = vmatpush.msra.mxu0 %v157
    %813 = vmatpush.msra.mxu0 %v156
    %814 = vmatpush.msra.mxu0 %v155
    %815 = vmatmul.f32.gmra.mxu0 %v797
    %v816 = vpop.f32.mrf.mxu0
    %v817 = vadd.f32 %v190, %v816
    %818 = vdwg.mxu0
    %v819 = vxor.u32 %v817, 2147483648
    %v820 = vmul.f32 %v819, 1.442695
    %v821 = vpow.pop %v820
    %v822 = vadd.f32 %v821, 1.0
    %v823 = vrcp.pop %v822
    %v824 = vmul.f32 %v822, %v823
    %v825 = vsub.f32 1.0, %v824
    %v826 = vmul.f32 %v823, %v825
    %v827 = vadd.f32 %v823, %v826
    %vm828 = vweird.f32 %v822
    %vm829 = vweird.f32 %v823
    %vm830 = vmor %vm828, %vm829
    %v831 = vsel %vm830, %v823, %v827
    %v832 = vand.u32 2147483647, %v822
    %vm833 = vcmp.eq.f32.partialorder %v832, 8.507059e+37
    %v834 = vand.u32 %v822, 2147483648
    %v835 = vor.u32 1.1754944e-38, %v834
    %v836 = vsel %vm833, %v835, %v831
    %v837 = vmul.f32 1.0, %v836
    %v838 = vtanh.pop %v817
    %v839 = vmul.f32 %v837, %v585
    %841 = vrot.lane.b32.xlu0 %v838, 64
    %v842 = vpop.permute.xlu0 %841
    %v844 = vmul.f32 %v837, %v842
    %846 = vrot.lane.b32.xlu0 %v844, 32
    %v847 = vpop.permute.xlu0 %846
    %v849 = vadd.f32 %v839, %v847
    %v850 = vtanh.pop %v849
    %852 = vrot.lane.b32.xlu0 %v850, 64
    %v853 = vpop.permute.xlu0 %852
    %v855 = vmul.f32 %v837, %v853
    %857 = vrot.lane.b32.xlu0 %v855, 32
    %v858 = vpop.permute.xlu0 %857
    %v859 = vsel %vm123, %v858, 0
    %861 = vmatpush.msra.mxu0 0.0
    %862 = vmatpush.msra.mxu0 0.0
    %863 = vmatpush.msra.mxu0 0.0
    %864 = vmatpush.msra.mxu0 0.0
    %865 = vmatpush.msra.mxu0 0.0
    %866 = vmatpush.msra.mxu0 0.0
    %867 = vmatpush.msra.mxu0 0.0
    %868 = vmatpush.msra.mxu0 0.0
    %869 = vmatpush.msra.mxu0 0.0
    %870 = vmatpush.msra.mxu0 0.0
    %871 = vmatpush.msra.mxu0 0.0
    %872 = vmatpush.msra.mxu0 0.0
    %873 = vmatpush.msra.mxu0 %v176
    %874 = vmatpush.msra.mxu0 %v175
    %875 = vmatpush.msra.mxu0 %v174
    %876 = vmatpush.msra.mxu0 %v173
    %877 = vmatmul.f32.gmra.mxu0 %v859
    %v878 = vpop.f32.mrf.mxu0
    %v879 = vadd.f32 %v258, %v878
    %880 = vdwg.mxu0
    %v882 = vrot.slane %v879, 1
    %v883 = vperm.slane %v879, 0
    %v884 = vperm.slane %v882, 0
    %v887 = vadd.f32 %v883, %v148
    %v888 = vadd.f32 %v884, %v151
    %v889 = vtanh.pop %v887
    %v890 = vtanh.pop %v888
    %v891 = vmul.f32 %v889, %v296
    %v892 = vmul.f32 %v890, %v296
    %v893 = vsel %vm123, %v891, 0.0
    %894 = vadd.xlane.f32.xlu0 %v893
    %v895 = vpop.xlane.xlu0 %894
    %v896 = vsel %vm123, %v892, 0.0
    %897 = vadd.xlane.f32.xlu0 %v896
    %v898 = vpop.xlane.xlu0 %897
    %vm899 = vcmp.eq.f32.partialorder %v754, 0.0
    %v902 = vperm.slane %v895, %v180
    %v903 = vperm.slane %v898, %v180
    %v904 = vsel %vm313, %v903, %v902
    %v906 = vsel %vm899, -inf, %v904
    %v907 = vsel %vm316, %v906, -inf
    %908 = vmax.xlane.f32.xlu0 %v907
    %v909 = vpop.xlane.xlu0 %908
    %v910 = vsub.f32 %v906, %v909
    %v911 = vmul.f32 %v910, 1.442695
    %v912 = vpow.pop %v911
    %v913 = vsel %vm316, %v912, 0.0
    %914 = vadd.xlane.f32.xlu0 %v913
    %v915 = vpop.xlane.xlu0 %914
    %v916 = vrcp.pop %v915
    %v917 = vmul.f32 %v915, %v916
    %v918 = vsub.f32 1.0, %v917
    %v919 = vmul.f32 %v916, %v918
    %v920 = vadd.f32 %v916, %v919
    %vm921 = vweird.f32 %v915
    %vm922 = vweird.f32 %v916
    %vm923 = vmor %vm921, %vm922
    %v924 = vsel %vm923, %v916, %v920
    %v925 = vand.u32 2147483647, %v915
    %vm926 = vcmp.eq.f32.partialorder %v925, 8.507059e+37
    %v927 = vand.u32 %v915, 2147483648
    %v928 = vor.u32 1.1754944e-38, %v927
    %v929 = vsel %vm926, %v928, %v924
    %v930 = vmul.f32 %v912, %v929
    %v931 = vperm.slane %v930, 0
    %v932 = vlaneseq
    %v933 = vshrl.u32 %v932, 7
    %935 = vset.pattern.permute.xlu0 %v933
    %936 = vperm.xlu0 %935, %v931
    %v937 = vpop.permute.xlu0 %936
    %v938 = vperm.slane %v930, 1
    %v939 = vlaneseq
    %v940 = vshrl.u32 %v939, 7
    %942 = vset.pattern.permute.xlu0 %v940
    %943 = vperm.xlu0 %942, %v938
    %v944 = vpop.permute.xlu0 %943
    %v945 = vmul.f32 %v148, %v937
    %v946 = vmul.f32 %v151, %v944
    %v947 = vsel %vm123, %v945, 0.0
    %v948 = vrot.slane %v947, 4
    %v949 = vadd.f32 %v947, %v948
    %v950 = vrot.slane %v949, 2
    %v951 = vadd.f32 %v949, %v950
    %v952 = vrot.slane %v951, 1
    %v953 = vadd.f32 %v951, %v952
    %v954 = vsel %vm123, %v946, 0.0
    %v955 = vrot.slane %v954, 4
    %v956 = vadd.f32 %v954, %v955
    %v957 = vrot.slane %v956, 2
    %v958 = vadd.f32 %v956, %v957
    %v959 = vrot.slane %v958, 1
    %v960 = vadd.f32 %v958, %v959
    %v963 = vsel %vm313, %v960, %v953
    %965 = vrot.lane.b32.xlu0 %v855, 64
    %v966 = vpop.permute.xlu0 %965
    %v968 = vsel %vm123, %v963, %v966
    %v970 = vsel %vm192, %v968, 0
    %972 = vmatpush.msra.mxu0 0.0
    %973 = vmatpush.msra.mxu0 0.0
    %974 = vmatpush.msra.mxu0 0.0
    %975 = vmatpush.msra.mxu0 0.0
    %976 = vmatpush.msra.mxu0 0.0
    %977 = vmatpush.msra.mxu0 0.0
    %978 = vmatpush.msra.mxu0 0.0
    %979 = vmatpush.msra.mxu0 0.0
    %980 = vmatpush.msra.mxu0 %v171
    %981 = vmatpush.msra.mxu0 %v170
    %982 = vmatpush.msra.mxu0 %v169
    %983 = vmatpush.msra.mxu0 %v168
    %984 = vmatpush.msra.mxu0 %v167
    %985 = vmatpush.msra.mxu0 %v166
    %986 = vmatpush.msra.mxu0 %v165
    %987 = vmatpush.msra.mxu0 %v164
    %988 = vmatmul.f32.gmra.mxu0 %v970
    %v989 = vpop.f32.mrf.mxu0
    %v990 = vadd.f32 %v416, %v989
    %991 = vdwg.mxu0
    %v992 = vtanh.pop %v990
    %v993 = vmul.f32 %v930, %v754
    %v994 = vsel %vm316, %v993, -inf
    %995 = vmax.xlane.f32.xlu0 %v994
    %v996 = vpop.xlane.xlu0 %995
    %vm997 = vcmp.eq.f32.partialorder %v993, %v996
    %v998 = vsel %vm997, %v180, 8
    %v999 = vsel %vm316, %v998, 2147483647
    %v1000 = vand.u32 %v999, 65535
    %v1001 = vshra.s32 %v999, 16
    %v1002 = vcvt.s32.f32 %v1000
    %v1003 = vcvt.s32.f32 %v1001
    %1004 = vmin.xlane.f32.xlu0 %v1003
    %v1005 = vpop.xlane.xlu0 %1004
    %vm1006 = vcmp.eq.f32.partialorder %v1003, %v1005
    %v1007 = vsel %vm1006, %v1002, inf
    %1008 = vmin.xlane.f32.xlu0 %v1007
    %v1009 = vpop.xlane.xlu0 %1008
    %v1010 = vcvt.f32.s32 %v1009
    %v1011 = vcvt.f32.s32 %v1005
    %v1012 = vshll.u32 %v1011, 16
    %v1013 = vadd.s32 %v1012, %v1010
    %vm1014 = vcmp.eq.s32.totalorder %v180, %v1013
    %v1015 = vsel %vm1014, 1, 0
    %v1016 = vcvt.s32.f32 %v1015
    %v1017 = vsub.f32 1.0, %v1016
    %v1018 = vmul.f32 %v754, %v1017
    %v1019 = vperm.slane %v1016, 0
    %v1020 = vlaneseq
    %v1021 = vshrl.u32 %v1020, 7
    %1023 = vset.pattern.permute.xlu0 %v1021
    %1024 = vperm.xlu0 %1023, %v1019
    %v1025 = vpop.permute.xlu0 %1024
    %v1026 = vperm.slane %v1016, 1
    %v1027 = vlaneseq
    %v1028 = vshrl.u32 %v1027, 7
    %1030 = vset.pattern.permute.xlu0 %v1028
    %1031 = vperm.xlu0 %1030, %v1026
    %v1032 = vpop.permute.xlu0 %1031
    %v1033 = vmul.f32 %v153, %v1025
    %v1034 = vmul.f32 %v154, %v1032
    %v1035 = vsel %vm123, %v1033, 0.0
    %v1036 = vrot.slane %v1035, 4
    %v1037 = vadd.f32 %v1035, %v1036
    %v1038 = vrot.slane %v1037, 2
    %v1039 = vadd.f32 %v1037, %v1038
    %v1040 = vrot.slane %v1039, 1
    %v1041 = vadd.f32 %v1039, %v1040
    %v1042 = vsel %vm123, %v1034, 0.0
    %v1043 = vrot.slane %v1042, 4
    %v1044 = vadd.f32 %v1042, %v1043
    %v1045 = vrot.slane %v1044, 2
    %v1046 = vadd.f32 %v1044, %v1045
    %v1047 = vrot.slane %v1046, 1
    %v1048 = vadd.f32 %v1046, %v1047
    %s1049 = scalar_lea.vmem [#allocation10], 4
    %1050 = vst.msk [vmem:[%s1049] sm:$0x3] %vm316, %v930
    %v1053 = vsel %vm313, %v1048, %v1041
    %1056 = vrot.lane.b32.xlu0 %v992, 32
    %v1057 = vpop.permute.xlu0 %1056
    %v1059 = vsel %vm123, %v1053, %v1057
    %v1061 = vsel %vm192, %v1059, 0
    %1063 = vmatpush.msra.mxu0 0.0
    %1064 = vmatpush.msra.mxu0 0.0
    %1065 = vmatpush.msra.mxu0 0.0
    %1066 = vmatpush.msra.mxu0 0.0
    %1067 = vmatpush.msra.mxu0 0.0
    %1068 = vmatpush.msra.mxu0 0.0
    %1069 = vmatpush.msra.mxu0 0.0
    %1070 = vmatpush.msra.mxu0 0.0
    %1071 = vmatpush.msra.mxu0 %v162
    %1072 = vmatpush.msra.mxu0 %v161
    %1073 = vmatpush.msra.mxu0 %v160
    %1074 = vmatpush.msra.mxu0 %v159
    %1075 = vmatpush.msra.mxu0 %v158
    %1076 = vmatpush.msra.mxu0 %v157
    %1077 = vmatpush.msra.mxu0 %v156
    %1078 = vmatpush.msra.mxu0 %v155
    %1079 = vmatmul.f32.gmra.mxu0 %v1061
    %v1080 = vpop.f32.mrf.mxu0
    %v1081 = vadd.f32 %v190, %v1080
    %1082 = vdwg.mxu0
    %v1083 = vxor.u32 %v1081, 2147483648
    %v1084 = vmul.f32 %v1083, 1.442695
    %v1085 = vpow.pop %v1084
    %v1086 = vadd.f32 %v1085, 1.0
    %v1087 = vrcp.pop %v1086
    %v1088 = vmul.f32 %v1086, %v1087
    %v1089 = vsub.f32 1.0, %v1088
    %v1090 = vmul.f32 %v1087, %v1089
    %v1091 = vadd.f32 %v1087, %v1090
    %vm1092 = vweird.f32 %v1086
    %vm1093 = vweird.f32 %v1087
    %vm1094 = vmor %vm1092, %vm1093
    %v1095 = vsel %vm1094, %v1087, %v1091
    %v1096 = vand.u32 2147483647, %v1086
    %vm1097 = vcmp.eq.f32.partialorder %v1096, 8.507059e+37
    %v1098 = vand.u32 %v1086, 2147483648
    %v1099 = vor.u32 1.1754944e-38, %v1098
    %v1100 = vsel %vm1097, %v1099, %v1095
    %v1101 = vmul.f32 1.0, %v1100
    %v1102 = vtanh.pop %v1081
    %v1103 = vmul.f32 %v1101, %v849
    %1105 = vrot.lane.b32.xlu0 %v1102, 64
    %v1106 = vpop.permute.xlu0 %1105
    %v1108 = vmul.f32 %v1101, %v1106
    %1110 = vrot.lane.b32.xlu0 %v1108, 32
    %v1111 = vpop.permute.xlu0 %1110
    %v1113 = vadd.f32 %v1103, %v1111
    %v1114 = vtanh.pop %v1113
    %1116 = vrot.lane.b32.xlu0 %v1114, 64
    %v1117 = vpop.permute.xlu0 %1116
    %v1119 = vmul.f32 %v1101, %v1117
    %1121 = vrot.lane.b32.xlu0 %v1119, 32
    %v1122 = vpop.permute.xlu0 %1121
    %v1123 = vsel %vm123, %v1122, 0
    %1125 = vmatpush.msra.mxu0 0.0
    %1126 = vmatpush.msra.mxu0 0.0
    %1127 = vmatpush.msra.mxu0 0.0
    %1128 = vmatpush.msra.mxu0 0.0
    %1129 = vmatpush.msra.mxu0 0.0
    %1130 = vmatpush.msra.mxu0 0.0
    %1131 = vmatpush.msra.mxu0 0.0
    %1132 = vmatpush.msra.mxu0 0.0
    %1133 = vmatpush.msra.mxu0 0.0
    %1134 = vmatpush.msra.mxu0 0.0
    %1135 = vmatpush.msra.mxu0 0.0
    %1136 = vmatpush.msra.mxu0 0.0
    %1137 = vmatpush.msra.mxu0 %v176
    %1138 = vmatpush.msra.mxu0 %v175
    %1139 = vmatpush.msra.mxu0 %v174
    %1140 = vmatpush.msra.mxu0 %v173
    %1141 = vmatmul.f32.gmra.mxu0 %v1123
    %v1142 = vpop.f32.mrf.mxu0
    %v1143 = vadd.f32 %v258, %v1142
    %1144 = vdwg.mxu0
    %v1146 = vrot.slane %v1143, 1
    %v1147 = vperm.slane %v1143, 0
    %v1148 = vperm.slane %v1146, 0
    %v1151 = vadd.f32 %v1147, %v148
    %v1152 = vadd.f32 %v1148, %v151
    %v1153 = vtanh.pop %v1151
    %v1154 = vtanh.pop %v1152
    %v1155 = vmul.f32 %v1153, %v296
    %v1156 = vmul.f32 %v1154, %v296
    %v1157 = vsel %vm123, %v1155, 0.0
    %1158 = vadd.xlane.f32.xlu0 %v1157
    %v1159 = vpop.xlane.xlu0 %1158
    %v1160 = vsel %vm123, %v1156, 0.0
    %1161 = vadd.xlane.f32.xlu0 %v1160
    %v1162 = vpop.xlane.xlu0 %1161
    %vm1163 = vcmp.eq.f32.partialorder %v1018, 0.0
    %v1166 = vperm.slane %v1159, %v180
    %v1167 = vperm.slane %v1162, %v180
    %v1168 = vsel %vm313, %v1167, %v1166
    %v1170 = vsel %vm1163, -inf, %v1168
    %v1171 = vsel %vm316, %v1170, -inf
    %1172 = vmax.xlane.f32.xlu0 %v1171
    %v1173 = vpop.xlane.xlu0 %1172
    %v1174 = vsub.f32 %v1170, %v1173
    %v1175 = vmul.f32 %v1174, 1.442695
    %v1176 = vpow.pop %v1175
    %v1177 = vsel %vm316, %v1176, 0.0
    %1178 = vadd.xlane.f32.xlu0 %v1177
    %v1179 = vpop.xlane.xlu0 %1178
    %v1180 = vrcp.pop %v1179
    %v1181 = vmul.f32 %v1179, %v1180
    %v1182 = vsub.f32 1.0, %v1181
    %v1183 = vmul.f32 %v1180, %v1182
    %v1184 = vadd.f32 %v1180, %v1183
    %vm1185 = vweird.f32 %v1179
    %vm1186 = vweird.f32 %v1180
    %vm1187 = vmor %vm1185, %vm1186
    %v1188 = vsel %vm1187, %v1180, %v1184
    %v1189 = vand.u32 2147483647, %v1179
    %vm1190 = vcmp.eq.f32.partialorder %v1189, 8.507059e+37
    %v1191 = vand.u32 %v1179, 2147483648
    %v1192 = vor.u32 1.1754944e-38, %v1191
    %v1193 = vsel %vm1190, %v1192, %v1188
    %v1194 = vmul.f32 %v1176, %v1193
    %v1195 = vperm.slane %v1194, 0
    %v1196 = vlaneseq
    %v1197 = vshrl.u32 %v1196, 7
    %1199 = vset.pattern.permute.xlu0 %v1197
    %1200 = vperm.xlu0 %1199, %v1195
    %v1201 = vpop.permute.xlu0 %1200
    %v1202 = vperm.slane %v1194, 1
    %v1203 = vlaneseq
    %v1204 = vshrl.u32 %v1203, 7
    %1206 = vset.pattern.permute.xlu0 %v1204
    %1207 = vperm.xlu0 %1206, %v1202
    %v1208 = vpop.permute.xlu0 %1207
    %v1209 = vmul.f32 %v148, %v1201
    %v1210 = vmul.f32 %v151, %v1208
    %v1211 = vsel %vm123, %v1209, 0.0
    %v1212 = vrot.slane %v1211, 4
    %v1213 = vadd.f32 %v1211, %v1212
    %v1214 = vrot.slane %v1213, 2
    %v1215 = vadd.f32 %v1213, %v1214
    %v1216 = vrot.slane %v1215, 1
    %v1217 = vadd.f32 %v1215, %v1216
    %v1218 = vsel %vm123, %v1210, 0.0
    %v1219 = vrot.slane %v1218, 4
    %v1220 = vadd.f32 %v1218, %v1219
    %v1221 = vrot.slane %v1220, 2
    %v1222 = vadd.f32 %v1220, %v1221
    %v1223 = vrot.slane %v1222, 1
    %v1224 = vadd.f32 %v1222, %v1223
    %v1227 = vsel %vm313, %v1224, %v1217
    %1229 = vrot.lane.b32.xlu0 %v1119, 64
    %v1230 = vpop.permute.xlu0 %1229
    %v1232 = vsel %vm123, %v1227, %v1230
    %v1234 = vsel %vm192, %v1232, 0
    %1236 = vmatpush.msra.mxu0 0.0
    %1237 = vmatpush.msra.mxu0 0.0
    %1238 = vmatpush.msra.mxu0 0.0
    %1239 = vmatpush.msra.mxu0 0.0
    %1240 = vmatpush.msra.mxu0 0.0
    %1241 = vmatpush.msra.mxu0 0.0
    %1242 = vmatpush.msra.mxu0 0.0
    %1243 = vmatpush.msra.mxu0 0.0
    %1244 = vmatpush.msra.mxu0 %v171
    %1245 = vmatpush.msra.mxu0 %v170
    %1246 = vmatpush.msra.mxu0 %v169
    %1247 = vmatpush.msra.mxu0 %v168
    %1248 = vmatpush.msra.mxu0 %v167
    %1249 = vmatpush.msra.mxu0 %v166
    %1250 = vmatpush.msra.mxu0 %v165
    %1251 = vmatpush.msra.mxu0 %v164
    %1252 = vmatmul.f32.gmra.mxu0 %v1234
    %v1253 = vpop.f32.mrf.mxu0
    %v1254 = vadd.f32 %v416, %v1253
    %1255 = vdwg.mxu0
    %v1256 = vtanh.pop %v1254
    %s1257 = scalar_lea.vmem [#allocation10], 6
    %1258 = vst.msk [vmem:[%s1257] sm:$0x3] %vm316, %v1194
    %vm1259 = vcmask 254976
    %1260 = vst.msk [vmem:[#allocation11] sm:$0x3] %vm1259, %v1256
    %1262 = vrot.lane.b32.xlu0 %v1113, 96
    %v1263 = vpop.permute.xlu0 %1262
    %1265 = vst.msk [vmem:[#allocation13] sm:$0x3] %vm1259, %v1263
    // Predicated region
    $region74: #{tpu_custom_call.1} parent=1 // pred_check
      _
    $region75: #{tpu_custom_call.1} parent=1 // pred_check_branch
      %1267 = sbr.rel (0) target = $region77
    $region76: #{tpu_custom_call.1} parent=1 // pred_region
      %1269 = vsyncadd [#allocation4], 0
      %s1270 = sshll.u32 [#allocation10], 4
      %s1271 = int_to_ptr.vmem [resolvable:$true] %s1270
      %s1272 = sshll.u32 %s14, 4
      %s1273 = int_to_ptr.hbm [resolvable:$true] %s1272
      %1278 = dma.vmem_to_hbm [thread:$0]  %s1271, 128, %s1273, [#allocation4], 32, 32, 2
    $region77: #{tpu_custom_call.1} parent=1 // pred_fallthru
      _
    // Predicated region
    $region78: #{tpu_custom_call.1} parent=1 // pred_check
      _
    $region79: #{tpu_custom_call.1} parent=1 // pred_check_branch
      %1280 = sbr.rel (0) target = $region81
    $region80: #{tpu_custom_call.1} parent=1 // pred_region
      %1282 = vsyncadd [#allocation12], 0
      %s1284 = sshll.u32 [#allocation11], 4
      %s1285 = int_to_ptr.vmem [resolvable:$true] %s1284
      %s1286 = sshll.u32 %s15, 4
      %s1287 = int_to_ptr.hbm [resolvable:$true] %s1286
      %1289 = dma.vmem_to_hbm [thread:$0]  %s1285, 32, %s1287, [#allocation12]
    $region81: #{tpu_custom_call.1} parent=1 // pred_fallthru
      _
    // Predicated region
    $region82: #{tpu_custom_call.1} parent=1 // pred_check
      _
    $region83: #{tpu_custom_call.1} parent=1 // pred_check_branch
      %1291 = sbr.rel (0) target = $region85
    $region84: #{tpu_custom_call.1} parent=1 // pred_region
      %1293 = vsyncadd [#allocation12], 0
      %s1295 = sshll.u32 [#allocation13], 4
      %s1296 = int_to_ptr.vmem [resolvable:$true] %s1295
      %s1297 = sshll.u32 %s16, 4
      %s1298 = int_to_ptr.hbm [resolvable:$true] %s1297
      %1300 = dma.vmem_to_hbm [thread:$0]  %s1296, 32, %s1298, [#allocation12]
    $region85: #{tpu_custom_call.1} parent=1 // pred_fallthru
      _
    // Predicated region
    $region86: #{tpu_custom_call.1} parent=1 // pred_check
      _
    $region87: #{tpu_custom_call.1} parent=1 // pred_check_branch
      %1302 = sbr.rel (0) target = $region89
    $region88: #{tpu_custom_call.1} parent=1 // pred_region
      %1304 = dma.done [#allocation4], 128
    $region89: #{tpu_custom_call.1} parent=1 // pred_fallthru
      _
    // Predicated region
    $region90: #{tpu_custom_call.1} parent=1 // pred_check
      _
    $region91: #{tpu_custom_call.1} parent=1 // pred_check_branch
      %1306 = sbr.rel (0) target = $region93
    $region92: #{tpu_custom_call.1} parent=1 // pred_region
      %1308 = dma.done [#allocation12], 32
    $region93: #{tpu_custom_call.1} parent=1 // pred_fallthru
      _
    // Predicated region
    $region94: #{tpu_custom_call.1} parent=1 // pred_check
      _
    $region95: #{tpu_custom_call.1} parent=1 // pred_check_branch
      %1310 = sbr.rel (0) target = $region97
    $region96: #{tpu_custom_call.1} parent=1 // pred_region
      %1312 = dma.done [#allocation12], 32
    $region97: #{tpu_custom_call.1} parent=1 // pred_fallthru
      _
    %1313 = vsyncpa [#allocation3], 1
    %1314 = vsyncpa [#allocation6], 1
    %1315 = vsyncpa [#allocation9], 1
    %1316 = vsyncpa [#allocation4], 1
    %1317 = vsyncpa [#allocation12], 1

</llo_original>
